<compile_context>
chip_gen: v7x
topology: tpu7x:2x2x1
jax: 0.10.0
libtpu: 0.0.40
codegen_flags: <defaults>
</compile_context>

<pallas_src>
import functools

import numpy as np
import jax
import jax.numpy as jnp
from jax import lax
from jax.experimental import pallas as pl
from jax.experimental.pallas import tpu as pltpu

_LOG2 = float(np.log(2.0))
_LANE = 128


def _ssp(x):
    """ShiftedSoftplus, numerically stable single form: softplus(x) - log(2)."""
    return jnp.maximum(x, 0.0) + jnp.log(1.0 + jnp.exp(-jnp.abs(x))) - _LOG2


def _round_up(x, m):
    return ((x + m - 1) // m) * m


def _pad2(a, rows, cols):
    return jnp.pad(a, ((0, rows - a.shape[0]), (0, cols - a.shape[1])))


# --------------------------------------------------------------------------- #
# Fused Interaction layer kernel (CFConvPBC + scaling + project_out)
# --------------------------------------------------------------------------- #
def _interaction_kernel(src_ref, dst_ref,                      # scalar prefetch (SMEM)
                        dist_ref, nodex_ref, cent_ref,         # streamed / resident inputs
                        wn_ref, bn_ref, we1_ref, be1_ref, we2_ref, be2_ref,
                        wo_ref, bo_ref, wp_ref, bp_ref,
                        out_ref,                               # (N_pad, F_pad) resident output
                        hv_ref, acc_ref, msg_ref,              # VMEM scratch
                        *, n_nodes, tile_e, gamma, inv_nb):
    f32 = jnp.float32
    t = pl.program_id(0)

    @pl.when(t == 0)
    def _init():
        # project_node once; keep it resident across all edge tiles.
        hv_ref[...] = jnp.dot(nodex_ref[...], wn_ref[...],
                              preferred_element_type=f32) + bn_ref[...]
        acc_ref[...] = jnp.zeros_like(acc_ref)

    # RBF expansion fused in-kernel: (tile_e, 1) distances -> (tile_e, C_pad).
    radial = dist_ref[...] - cent_ref[...]
    rbf = jnp.exp(-gamma * radial * radial)

    # project_edge: Linear -> SSP -> Linear -> SSP   (tile_e, H_pad), on the MXU.
    e1 = _ssp(jnp.dot(rbf, we1_ref[...], preferred_element_type=f32) + be1_ref[...])
    he = _ssp(jnp.dot(e1, we2_ref[...], preferred_element_type=f32) + be2_ref[...])
    msg_ref[...] = he

    base = t * tile_e

    # Per-edge gather (hv[src]) * filter, scatter-add into the node accumulator.
    # Edge ids come from SMEM; rows are single dynamic sublane slices in VMEM.
    def edge_body(i, carry):
        s = src_ref[base + i]
        d = dst_ref[base + i]
        m = hv_ref[pl.ds(s, 1), :] * msg_ref[pl.ds(i, 1), :]
        acc_ref[pl.ds(d, 1), :] = acc_ref[pl.ds(d, 1), :] + m
        return carry

    lax.fori_loop(0, tile_e, edge_body, 0)

    @pl.when(t == pl.num_programs(0) - 1)
    def _finalize():
        # CFConv project_out (+SSP), /max_neighbors, Interaction project_out, /max_neighbor
        conv = _ssp(jnp.dot(acc_ref[...], wo_ref[...],
                            preferred_element_type=f32) + bo_ref[...])
        y = jnp.dot(conv * inv_nb, wp_ref[...], preferred_element_type=f32) + bp_ref[...]
        y = y * inv_nb
        rows = lax.broadcasted_iota(jnp.int32, y.shape, 0)
        out_ref[...] = jnp.where(rows < n_nodes, y, 0.0)   # zero padded node rows


def _interaction_pallas(x, dists, src_pad, dst_pad, centers_pad, lp, *,
                        n_nodes, tile_e, gamma, inv_nb,
                        n_pad, f_pad, c_pad, h_pad, e_pad):
    grid = (e_pad // tile_e,)

    res = lambda t, s, d: (0, 0)          # resident operands (never re-DMA'd)
    edge_map = lambda t, s, d: (t, 0)     # streamed edge tiles

    in_specs = [
        pl.BlockSpec((tile_e, 1), edge_map),      # edge distances
        pl.BlockSpec((n_pad, f_pad), res),        # node features
        pl.BlockSpec((1, c_pad), res),            # rbf centers
        pl.BlockSpec((f_pad, h_pad), res), pl.BlockSpec((1, h_pad), res),   # wn, bn
        pl.BlockSpec((c_pad, h_pad), res), pl.BlockSpec((1, h_pad), res),   # we1, be1
        pl.BlockSpec((h_pad, h_pad), res), pl.BlockSpec((1, h_pad), res),   # we2, be2
        pl.BlockSpec((h_pad, f_pad), res), pl.BlockSpec((1, f_pad), res),   # wo, bo
        pl.BlockSpec((f_pad, f_pad), res), pl.BlockSpec((1, f_pad), res),   # wp, bp
    ]
    out_spec = pl.BlockSpec((n_pad, f_pad), res)

    kernel = functools.partial(_interaction_kernel, n_nodes=n_nodes, tile_e=tile_e,
                               gamma=gamma, inv_nb=inv_nb)

    flops = 2 * (n_pad * f_pad * h_pad
                 + e_pad * (c_pad * h_pad + h_pad * h_pad + h_pad)
                 + n_pad * h_pad * f_pad + n_pad * f_pad * f_pad)
    transc = e_pad * (c_pad + 2 * h_pad) + n_pad * f_pad
    nbytes = 4 * (e_pad + 2 * e_pad + 2 * n_pad * f_pad + c_pad
                  + f_pad * h_pad + c_pad * h_pad + h_pad * h_pad
                  + h_pad * f_pad + f_pad * f_pad + 4 * h_pad + 2 * f_pad)

    return pl.pallas_call(
        kernel,
        out_shape=jax.ShapeDtypeStruct((n_pad, f_pad), jnp.float32),
        grid_spec=pltpu.PrefetchScalarGridSpec(
            num_scalar_prefetch=2,
            grid=grid,
            in_specs=in_specs,
            out_specs=out_spec,
            scratch_shapes=[
                pltpu.VMEM((n_pad, h_pad), jnp.float32),   # hv (projected nodes)
                pltpu.VMEM((n_pad, h_pad), jnp.float32),   # message accumulator
                pltpu.VMEM((tile_e, h_pad), jnp.float32),  # per-tile edge filter
            ],
        ),
        compiler_params=pltpu.CompilerParams(
            dimension_semantics=("arbitrary",),            # reduction over edge tiles
            vmem_limit_bytes=48 * 1024 * 1024,             # explicit cap, fits v7x's 64 MiB
        ),
        cost_estimate=pl.CostEstimate(flops=int(flops), transcendentals=int(transc),
                                      bytes_accessed=int(nbytes)),
    )(src_pad, dst_pad, dists, x, centers_pad,
      lp["wn"], lp["bn"], lp["we1"], lp["be1"], lp["we2"], lp["be2"],
      lp["wo"], lp["bo"], lp["wp"], lp["bp"])


# --------------------------------------------------------------------------- #
# MLPNodeReadout kernel (Linear -> SSP -> Linear -> masked node-sum)
# --------------------------------------------------------------------------- #
def _readout_kernel(x_ref, w1_ref, b1_ref, w2_ref, b2_ref, out_ref, *, n_nodes):
    f32 = jnp.float32
    h = _ssp(jnp.dot(x_ref[...], w1_ref[...], preferred_element_type=f32) + b1_ref[...])
    y = jnp.dot(h, w2_ref[...], preferred_element_type=f32) + b2_ref[...]
    rows = lax.broadcasted_iota(jnp.int32, y.shape, 0)
    y = jnp.where(rows < n_nodes, y, 0.0)        # mask padded node rows
    out_ref[...] = jnp.sum(y, axis=0, keepdims=True)


def _readout_pallas(x, w1, b1, w2, b2, *, n_nodes):
    t_pad = w2.shape[1]
    vmem = pl.BlockSpec(memory_space=pltpu.MemorySpace.VMEM)
    kernel = functools.partial(_readout_kernel, n_nodes=n_nodes)
    return pl.pallas_call(
        kernel,
        out_shape=jax.ShapeDtypeStruct((1, t_pad), jnp.float32),
        in_specs=[vmem] * 5,
        out_specs=vmem,
    )(x, w1, b1, w2, b2)


# --------------------------------------------------------------------------- #
# Full predictor wrapper
# --------------------------------------------------------------------------- #
def schnet_periodic_predictor(node_types, edge_dists, src, dst, params, *,
                              gamma, max_neighbor=12.0, tile_e=256):
    """Forward pass of SchNetPeriodicPredictor on a single graph."""
    N = int(node_types.shape[0])
    E = int(edge_dists.shape[0])
    F = int(params["embed"].shape[1])
    C = int(params["centers"].shape[0])
    assert tile_e % 8 == 0

    f_pad = _round_up(F, _LANE)
    c_pad = _round_up(C, _LANE)
    n_pad = _round_up(N + 1, 8)           # +1 reserves a discard row for dummy edges
    te = min(tile_e, _round_up(E, 8))
    e_pad = _round_up(E, te)
    dummy = n_pad - 1

    # ---- cheap XLA glue: embedding lookup + padding -------------------------
    x0 = jnp.take(params["embed"], node_types, axis=0)          # (N, F)
    x = _pad2(x0, n_pad, f_pad)

    dists = jnp.pad(edge_dists.astype(jnp.float32), ((0, e_pad - E), (0, 0)))
    pad_ids = jnp.full((e_pad - E,), dummy, jnp.int32)
    src_pad = jnp.concatenate([src.astype(jnp.int32), pad_ids])
    dst_pad = jnp.concatenate([dst.astype(jnp.int32), pad_ids])
    centers_pad = _pad2(params["centers"][None, :].astype(jnp.float32), 1, c_pad)

    inv_nb = 1.0 / float(max_neighbor)

    # ---- stacked Interaction layers (one fused Pallas kernel each) ----------
    for layer in params["layers"]:
        H = int(layer["wn"].shape[1])
        h_pad = _round_up(H, _LANE)
        lp = dict(
            wn=_pad2(layer["wn"], f_pad, h_pad), bn=_pad2(layer["bn"], 1, h_pad),
            we1=_pad2(layer["we1"], c_pad, h_pad), be1=_pad2(layer["be1"], 1, h_pad),
            we2=_pad2(layer["we2"], h_pad, h_pad), be2=_pad2(layer["be2"], 1, h_pad),
            wo=_pad2(layer["wo"], h_pad, f_pad), bo=_pad2(layer["bo"], 1, f_pad),
            wp=_pad2(layer["wp"], f_pad, f_pad), bp=_pad2(layer["bp"], 1, f_pad),
        )
        x = _interaction_pallas(x, dists, src_pad, dst_pad, centers_pad, lp,
                                n_nodes=N, tile_e=te, gamma=float(gamma), inv_nb=inv_nb,
                                n_pad=n_pad, f_pad=f_pad, c_pad=c_pad, h_pad=h_pad,
                                e_pad=e_pad)

    # ---- readout -------------------------------------------------------------
    P = int(params["w1"].shape[1])
    T = int(params["w2"].shape[1])
    p_pad = _round_up(P, _LANE)
    t_pad = _round_up(T, _LANE)
    w1 = _pad2(params["w1"], f_pad, p_pad)
    b1 = _pad2(params["b1"], 1, p_pad)
    w2 = _pad2(params["w2"], p_pad, t_pad)
    b2 = _pad2(params["b2"], 1, t_pad)
    graph_pad = _readout_pallas(x, w1, b1, w2, b2, n_nodes=N)   # (1, t_pad)
    return graph_pad[:, :T]


# --------------------------------------------------------------------------- #
# Pure-JAX reference matching the PyTorch module semantics
# --------------------------------------------------------------------------- #
def reference_forward(node_types, edge_dists, src, dst, params, *,
                      gamma, max_neighbor=12.0):
    N = node_types.shape[0]
    x = params["embed"][node_types]
    rbf = jnp.exp(-gamma * (edge_dists - params["centers"][None, :]) ** 2)
    for lyr in params["layers"]:
        hv = x @ lyr["wn"] + lyr["bn"]
        e1 = _ssp(rbf @ lyr["we1"] + lyr["be1"])
        he = _ssp(e1 @ lyr["we2"] + lyr["be2"])
        m = hv[src] * he
        h = jax.ops.segment_sum(m, dst, num_segments=N)
        conv = _ssp(h @ lyr["wo"] + lyr["bo"]) / max_neighbor     # Interaction scaling
        x = (conv @ lyr["wp"] + lyr["bp"]) / max_neighbor         # GNN-level scaling
    h = _ssp(x @ params["w1"] + params["b1"])
    y = h @ params["w2"] + params["b2"]
    return jnp.sum(y, axis=0, keepdims=True)                      # single-graph sum readout


def init_params(key, *, num_node_types, node_feats, hidden_feats, num_centers,
                predictor_hidden, n_tasks):
    keys = iter(jax.random.split(key, 8 + 10 * len(hidden_feats) + 8))

    def lin(fan_in, fan_out):
        bound = 1.0 / np.sqrt(fan_in)
        w = jax.random.uniform(next(keys), (fan_in, fan_out), jnp.float32, -bound, bound)
        b = jax.random.uniform(next(keys), (1, fan_out), jnp.float32, -bound, bound)
        return w, b

    embed = jax.random.normal(next(keys), (num_node_types, node_feats), jnp.float32)
    layers = []
    for h in hidden_feats:
        wn, bn = lin(node_feats, h)          # CFConv project_node
        we1, be1 = lin(num_centers, h)       # CFConv project_edge[0]
        we2, be2 = lin(h, h)                 # CFConv project_edge[2]
        wo, bo = lin(h, node_feats)          # CFConv project_out[0]
        wp, bp = lin(node_feats, node_feats) # Interaction project_out
        layers.append(dict(wn=wn, bn=bn, we1=we1, be1=be1, we2=we2, be2=be2,
                           wo=wo, bo=bo, wp=wp, bp=bp))
    w1, b1 = lin(node_feats, predictor_hidden)   # readout in_project
    w2, b2 = lin(predictor_hidden, n_tasks)      # readout out_project
    return dict(embed=embed, layers=layers, w1=w1, b1=b1, w2=w2, b2=b2)


if __name__ == "__main__":
    # Small shapes consistent with the module.
    N, E = 10, 22
    node_feats = 32
    hidden_feats = [32, 32, 32]
    num_node_types = 20
    cutoff, gap = 4.0, 0.5
    predictor_hidden = 32
    n_tasks = 2
    max_neighbor = 12.0

    num_centers = int(np.ceil((cutoff - 0.0) / gap))
    gamma = 1.0 / gap

    key = jax.random.PRNGKey(0)
    k1, k2, k3, k4, k5 = jax.random.split(key, 5)
    node_types = jax.random.randint(k1, (N,), 0, num_node_types, jnp.int32)
    edge_dists = jax.random.uniform(k2, (E, 1), jnp.float32, 0.1, cutoff)
    src = jax.random.randint(k3, (E,), 0, N, jnp.int32)
    dst = jax.random.randint(k4, (E,), 0, N, jnp.int32)

    params = init_params(k5, num_node_types=num_node_types, node_feats=node_feats,
                         hidden_feats=hidden_feats, num_centers=num_centers,
                         predictor_hidden=predictor_hidden, n_tasks=n_tasks)
    params["centers"] = jnp.asarray(np.linspace(0.0, cutoff, num_centers), jnp.float32)

    out = schnet_periodic_predictor(node_types, edge_dists, src, dst, params,
                                    gamma=gamma, max_neighbor=max_neighbor, tile_e=8)
    out = jax.block_until_ready(out)

    ref = reference_forward(node_types, edge_dists, src, dst, params,
                            gamma=gamma, max_neighbor=max_neighbor)
    np.testing.assert_allclose(np.asarray(out), np.asarray(ref), rtol=1e-4, atol=1e-5)

    print("KERNEL_OK")
</pallas_src>

<mosaic_0001>
module attributes {stable_mosaic.version = 11 : i64} {
  func.func @_interaction_kernel(%arg0: i32, %arg1: memref<24xi32, #tpu.memory_space<smem>>, %arg2: memref<24xi32, #tpu.memory_space<smem>>, %arg3: memref<8x1xf32, #tpu.memory_space<vmem>>, %arg4: memref<16x128xf32, #tpu.memory_space<vmem>>, %arg5: memref<1x128xf32, #tpu.memory_space<vmem>>, %arg6: memref<128x128xf32, #tpu.memory_space<vmem>>, %arg7: memref<1x128xf32, #tpu.memory_space<vmem>>, %arg8: memref<128x128xf32, #tpu.memory_space<vmem>>, %arg9: memref<1x128xf32, #tpu.memory_space<vmem>>, %arg10: memref<128x128xf32, #tpu.memory_space<vmem>>, %arg11: memref<1x128xf32, #tpu.memory_space<vmem>>, %arg12: memref<128x128xf32, #tpu.memory_space<vmem>>, %arg13: memref<1x128xf32, #tpu.memory_space<vmem>>, %arg14: memref<128x128xf32, #tpu.memory_space<vmem>>, %arg15: memref<1x128xf32, #tpu.memory_space<vmem>>, %arg16: memref<16x128xf32, #tpu.memory_space<vmem>>, %arg17: memref<16x128xf32, #tpu.memory_space<vmem>>, %arg18: memref<16x128xf32, #tpu.memory_space<vmem>>, %arg19: memref<8x128xf32, #tpu.memory_space<vmem>>) attributes {dimension_semantics = [#tpu.dimension_semantics<arbitrary>], iteration_bounds = array<i64: 3>, scalar_prefetch = 2 : i64, scratch_operands = 3 : i64, tpu.core_type = #tpu.core_type<tc>, window_params = [{transform_indices = @transform_0, window_bounds = array<i64: 8, 1>}, {pipeline_mode = #tpu.pipeline_mode<synchronous>, transform_indices = @transform_1, window_bounds = array<i64: 16, 128>}, {pipeline_mode = #tpu.pipeline_mode<synchronous>, transform_indices = @transform_2, window_bounds = array<i64: 1, 128>}, {pipeline_mode = #tpu.pipeline_mode<synchronous>, transform_indices = @transform_3, window_bounds = array<i64: 128, 128>}, {pipeline_mode = #tpu.pipeline_mode<synchronous>, transform_indices = @transform_4, window_bounds = array<i64: 1, 128>}, {pipeline_mode = #tpu.pipeline_mode<synchronous>, transform_indices = @transform_5, window_bounds = array<i64: 128, 128>}, {pipeline_mode = #tpu.pipeline_mode<synchronous>, transform_indices = @transform_6, window_bounds = array<i64: 1, 128>}, {pipeline_mode = #tpu.pipeline_mode<synchronous>, transform_indices = @transform_7, window_bounds = array<i64: 128, 128>}, {pipeline_mode = #tpu.pipeline_mode<synchronous>, transform_indices = @transform_8, window_bounds = array<i64: 1, 128>}, {pipeline_mode = #tpu.pipeline_mode<synchronous>, transform_indices = @transform_9, window_bounds = array<i64: 128, 128>}, {pipeline_mode = #tpu.pipeline_mode<synchronous>, transform_indices = @transform_10, window_bounds = array<i64: 1, 128>}, {pipeline_mode = #tpu.pipeline_mode<synchronous>, transform_indices = @transform_11, window_bounds = array<i64: 128, 128>}, {pipeline_mode = #tpu.pipeline_mode<synchronous>, transform_indices = @transform_12, window_bounds = array<i64: 1, 128>}, {pipeline_mode = #tpu.pipeline_mode<synchronous>, transform_indices = @transform_13, window_bounds = array<i64: 16, 128>}]} {
    %c0_i32 = arith.constant 0 : i32
    %0 = arith.cmpi eq, %arg0, %c0_i32 : i32
    %1 = arith.extui %0 : i1 to i32
    %c0_i32_0 = arith.constant 0 : i32
    %2 = arith.cmpi ne, %1, %c0_i32_0 : i32
    scf.if %2 {
      %c0_28 = arith.constant 0 : index
      %c0_29 = arith.constant 0 : index
      %52 = vector.load %arg4[%c0_28, %c0_29] : memref<16x128xf32, #tpu.memory_space<vmem>>, vector<16x128xf32>
      %c0_30 = arith.constant 0 : index
      %c0_31 = arith.constant 0 : index
      %53 = vector.load %arg6[%c0_30, %c0_31] : memref<128x128xf32, #tpu.memory_space<vmem>>, vector<128x128xf32>
      %cst_32 = arith.constant dense<0.000000e+00> : vector<16x128xf32>
      %54 = tpu.matmul %52, %53, %cst_32 {dimension_numbers = #tpu.dot_dimension_numbers<[1], [0], [0], [1], [0, 0, 1, 1], [], []>} : vector<16x128xf32>, vector<128x128xf32>, vector<16x128xf32> -> vector<16x128xf32>
      %c0_33 = arith.constant 0 : index
      %c0_34 = arith.constant 0 : index
      %55 = vector.load %arg7[%c0_33, %c0_34] : memref<1x128xf32, #tpu.memory_space<vmem>>, vector<1x128xf32>
      %56 = vector.broadcast %55 : vector<1x128xf32> to vector<16x128xf32>
      %57 = arith.addf %54, %56 : vector<16x128xf32>
      %c0_35 = arith.constant 0 : index
      %c0_36 = arith.constant 0 : index
      %58 = vector.load %arg17[%c0_35, %c0_36] : memref<16x128xf32, #tpu.memory_space<vmem>>, vector<16x128xf32>
      tpu.vector_store %arg17[%c0_35, %c0_36], %57 {strides = array<i32>} : memref<16x128xf32, #tpu.memory_space<vmem>>, vector<16x128xf32>,
      %cst_37 = arith.constant 0.000000e+00 : f32
      %59 = vector.broadcast %cst_37 : f32 to vector<16x128xf32>
      %c0_38 = arith.constant 0 : index
      %c0_39 = arith.constant 0 : index
      %60 = vector.load %arg18[%c0_38, %c0_39] : memref<16x128xf32, #tpu.memory_space<vmem>>, vector<16x128xf32>
      tpu.vector_store %arg18[%c0_38, %c0_39], %59 {strides = array<i32>} : memref<16x128xf32, #tpu.memory_space<vmem>>, vector<16x128xf32>,
    } else {
    }
    %c0 = arith.constant 0 : index
    %c0_1 = arith.constant 0 : index
    %3 = vector.load %arg3[%c0, %c0_1] : memref<8x1xf32, #tpu.memory_space<vmem>>, vector<8x1xf32>
    %c0_2 = arith.constant 0 : index
    %c0_3 = arith.constant 0 : index
    %4 = vector.load %arg5[%c0_2, %c0_3] : memref<1x128xf32, #tpu.memory_space<vmem>>, vector<1x128xf32>
    %5 = vector.broadcast %3 : vector<8x1xf32> to vector<8x128xf32>
    %6 = vector.broadcast %4 : vector<1x128xf32> to vector<8x128xf32>
    %7 = arith.subf %5, %6 : vector<8x128xf32>
    %cst = arith.constant -2.000000e+00 : f32
    %8 = vector.broadcast %cst : f32 to vector<8x128xf32>
    %9 = arith.mulf %8, %7 : vector<8x128xf32>
    %10 = arith.mulf %9, %7 : vector<8x128xf32>
    %11 = math.exp %10 : vector<8x128xf32>
    %c0_4 = arith.constant 0 : index
    %c0_5 = arith.constant 0 : index
    %12 = vector.load %arg8[%c0_4, %c0_5] : memref<128x128xf32, #tpu.memory_space<vmem>>, vector<128x128xf32>
    %cst_6 = arith.constant dense<0.000000e+00> : vector<8x128xf32>
    %13 = tpu.matmul %11, %12, %cst_6 {dimension_numbers = #tpu.dot_dimension_numbers<[1], [0], [0], [1], [0, 0, 1, 1], [], []>} : vector<8x128xf32>, vector<128x128xf32>, vector<8x128xf32> -> vector<8x128xf32>
    %c0_7 = arith.constant 0 : index
    %c0_8 = arith.constant 0 : index
    %14 = vector.load %arg9[%c0_7, %c0_8] : memref<1x128xf32, #tpu.memory_space<vmem>>, vector<1x128xf32>
    %15 = vector.broadcast %14 : vector<1x128xf32> to vector<8x128xf32>
    %16 = arith.addf %13, %15 : vector<8x128xf32>
    %cst_9 = arith.constant 0.000000e+00 : f32
    %17 = vector.broadcast %cst_9 : f32 to vector<8x128xf32>
    %18 = arith.maximumf %16, %17 : vector<8x128xf32>
    %19 = math.absf %16 : vector<8x128xf32>
    %cst_10 = arith.constant 0.000000e+00 : f32
    %20 = vector.broadcast %cst_10 : f32 to vector<8x128xf32>
    %21 = arith.subf %20, %19 : vector<8x128xf32>
    %22 = math.exp %21 : vector<8x128xf32>
    %cst_11 = arith.constant 1.000000e+00 : f32
    %23 = vector.broadcast %cst_11 : f32 to vector<8x128xf32>
    %24 = arith.addf %23, %22 : vector<8x128xf32>
    %25 = math.log %24 : vector<8x128xf32>
    %26 = arith.addf %18, %25 : vector<8x128xf32>
    %cst_12 = arith.constant 0.693147182 : f32
    %27 = vector.broadcast %cst_12 : f32 to vector<8x128xf32>
    %28 = arith.subf %26, %27 : vector<8x128xf32>
    %c0_13 = arith.constant 0 : index
    %c0_14 = arith.constant 0 : index
    %29 = vector.load %arg10[%c0_13, %c0_14] : memref<128x128xf32, #tpu.memory_space<vmem>>, vector<128x128xf32>
    %cst_15 = arith.constant dense<0.000000e+00> : vector<8x128xf32>
    %30 = tpu.matmul %28, %29, %cst_15 {dimension_numbers = #tpu.dot_dimension_numbers<[1], [0], [0], [1], [0, 0, 1, 1], [], []>} : vector<8x128xf32>, vector<128x128xf32>, vector<8x128xf32> -> vector<8x128xf32>
    %c0_16 = arith.constant 0 : index
    %c0_17 = arith.constant 0 : index
    %31 = vector.load %arg11[%c0_16, %c0_17] : memref<1x128xf32, #tpu.memory_space<vmem>>, vector<1x128xf32>
    %32 = vector.broadcast %31 : vector<1x128xf32> to vector<8x128xf32>
    %33 = arith.addf %30, %32 : vector<8x128xf32>
    %cst_18 = arith.constant 0.000000e+00 : f32
    %34 = vector.broadcast %cst_18 : f32 to vector<8x128xf32>
    %35 = arith.maximumf %33, %34 : vector<8x128xf32>
    %36 = math.absf %33 : vector<8x128xf32>
    %cst_19 = arith.constant 0.000000e+00 : f32
    %37 = vector.broadcast %cst_19 : f32 to vector<8x128xf32>
    %38 = arith.subf %37, %36 : vector<8x128xf32>
    %39 = math.exp %38 : vector<8x128xf32>
    %cst_20 = arith.constant 1.000000e+00 : f32
    %40 = vector.broadcast %cst_20 : f32 to vector<8x128xf32>
    %41 = arith.addf %40, %39 : vector<8x128xf32>
    %42 = math.log %41 : vector<8x128xf32>
    %43 = arith.addf %35, %42 : vector<8x128xf32>
    %cst_21 = arith.constant 0.693147182 : f32
    %44 = vector.broadcast %cst_21 : f32 to vector<8x128xf32>
    %45 = arith.subf %43, %44 : vector<8x128xf32>
    %c0_22 = arith.constant 0 : index
    %c0_23 = arith.constant 0 : index
    %46 = vector.load %arg19[%c0_22, %c0_23] : memref<8x128xf32, #tpu.memory_space<vmem>>, vector<8x128xf32>
    tpu.vector_store %arg19[%c0_22, %c0_23], %45 {strides = array<i32>} : memref<8x128xf32, #tpu.memory_space<vmem>>, vector<8x128xf32>,
    %c8_i32 = arith.constant 8 : i32
    %47 = arith.muli %arg0, %c8_i32 : i32
    %c0_i32_24 = arith.constant 0 : i32
    %c8_i32_25 = arith.constant 8 : i32
    %48 = arith.addi %c0_i32_24, %c8_i32_25 : i32
    %c1_i32 = arith.constant 1 : i32
    scf.for %arg20 = %c0_i32_24 to %48 step %c1_i32  : i32 {
      %52 = arith.addi %47, %arg20 : i32
      %53 = arith.index_cast %52 : i32 to index
      %54 = memref.load %arg1[%53] : memref<24xi32, #tpu.memory_space<smem>>
      %55 = arith.addi %47, %arg20 : i32
      %56 = arith.index_cast %55 : i32 to index
      %57 = memref.load %arg2[%56] : memref<24xi32, #tpu.memory_space<smem>>
      %58 = arith.index_cast %54 : i32 to index
      %c0_28 = arith.constant 0 : index
      %59 = vector.load %arg17[%58, %c0_28] : memref<16x128xf32, #tpu.memory_space<vmem>>, vector<1x128xf32>
      %60 = arith.index_cast %arg20 : i32 to index
      %c0_29 = arith.constant 0 : index
      %61 = vector.load %arg19[%60, %c0_29] : memref<8x128xf32, #tpu.memory_space<vmem>>, vector<1x128xf32>
      %62 = arith.mulf %59, %61 : vector<1x128xf32>
      %63 = arith.index_cast %57 : i32 to index
      %c0_30 = arith.constant 0 : index
      %64 = vector.load %arg18[%63, %c0_30] : memref<16x128xf32, #tpu.memory_space<vmem>>, vector<1x128xf32>
      %65 = arith.addf %64, %62 : vector<1x128xf32>
      %66 = arith.index_cast %57 : i32 to index
      %c0_31 = arith.constant 0 : index
      %67 = vector.load %arg18[%66, %c0_31] : memref<16x128xf32, #tpu.memory_space<vmem>>, vector<1x128xf32>
      tpu.vector_store %arg18[%66, %c0_31], %65 {strides = array<i32>} : memref<16x128xf32, #tpu.memory_space<vmem>>, vector<1x128xf32>,
    }
    %c8_i32_26 = arith.constant 8 : i32
    %c2_i32 = arith.constant 2 : i32
    %49 = arith.cmpi eq, %arg0, %c2_i32 : i32
    %50 = arith.extui %49 : i1 to i32
    %c0_i32_27 = arith.constant 0 : i32
    %51 = arith.cmpi ne, %50, %c0_i32_27 : i32
    scf.if %51 {
      %c0_28 = arith.constant 0 : index
      %c0_29 = arith.constant 0 : index
      %52 = vector.load %arg18[%c0_28, %c0_29] : memref<16x128xf32, #tpu.memory_space<vmem>>, vector<16x128xf32>
      %c0_30 = arith.constant 0 : index
      %c0_31 = arith.constant 0 : index
      %53 = vector.load %arg12[%c0_30, %c0_31] : memref<128x128xf32, #tpu.memory_space<vmem>>, vector<128x128xf32>
      %cst_32 = arith.constant dense<0.000000e+00> : vector<16x128xf32>
      %54 = tpu.matmul %52, %53, %cst_32 {dimension_numbers = #tpu.dot_dimension_numbers<[1], [0], [0], [1], [0, 0, 1, 1], [], []>} : vector<16x128xf32>, vector<128x128xf32>, vector<16x128xf32> -> vector<16x128xf32>
      %c0_33 = arith.constant 0 : index
      %c0_34 = arith.constant 0 : index
      %55 = vector.load %arg13[%c0_33, %c0_34] : memref<1x128xf32, #tpu.memory_space<vmem>>, vector<1x128xf32>
      %56 = vector.broadcast %55 : vector<1x128xf32> to vector<16x128xf32>
      %57 = arith.addf %54, %56 : vector<16x128xf32>
      %cst_35 = arith.constant 0.000000e+00 : f32
      %58 = vector.broadcast %cst_35 : f32 to vector<16x128xf32>
      %59 = arith.maximumf %57, %58 : vector<16x128xf32>
      %60 = math.absf %57 : vector<16x128xf32>
      %cst_36 = arith.constant 0.000000e+00 : f32
      %61 = vector.broadcast %cst_36 : f32 to vector<16x128xf32>
      %62 = arith.subf %61, %60 : vector<16x128xf32>
      %63 = math.exp %62 : vector<16x128xf32>
      %cst_37 = arith.constant 1.000000e+00 : f32
      %64 = vector.broadcast %cst_37 : f32 to vector<16x128xf32>
      %65 = arith.addf %64, %63 : vector<16x128xf32>
      %66 = math.log %65 : vector<16x128xf32>
      %67 = arith.addf %59, %66 : vector<16x128xf32>
      %cst_38 = arith.constant 0.693147182 : f32
      %68 = vector.broadcast %cst_38 : f32 to vector<16x128xf32>
      %69 = arith.subf %67, %68 : vector<16x128xf32>
      %cst_39 = arith.constant 0.0833333358 : f32
      %70 = vector.broadcast %cst_39 : f32 to vector<16x128xf32>
      %71 = arith.mulf %69, %70 : vector<16x128xf32>
      %c0_40 = arith.constant 0 : index
      %c0_41 = arith.constant 0 : index
      %72 = vector.load %arg14[%c0_40, %c0_41] : memref<128x128xf32, #tpu.memory_space<vmem>>, vector<128x128xf32>
      %cst_42 = arith.constant dense<0.000000e+00> : vector<16x128xf32>
      %73 = tpu.matmul %71, %72, %cst_42 {dimension_numbers = #tpu.dot_dimension_numbers<[1], [0], [0], [1], [0, 0, 1, 1], [], []>} : vector<16x128xf32>, vector<128x128xf32>, vector<16x128xf32> -> vector<16x128xf32>
      %c0_43 = arith.constant 0 : index
      %c0_44 = arith.constant 0 : index
      %74 = vector.load %arg15[%c0_43, %c0_44] : memref<1x128xf32, #tpu.memory_space<vmem>>, vector<1x128xf32>
      %75 = vector.broadcast %74 : vector<1x128xf32> to vector<16x128xf32>
      %76 = arith.addf %73, %75 : vector<16x128xf32>
      %cst_45 = arith.constant 0.0833333358 : f32
      %77 = vector.broadcast %cst_45 : f32 to vector<16x128xf32>
      %78 = arith.mulf %76, %77 : vector<16x128xf32>
      %79 = tpu.iota {dimensions = array<i32: 0>} : vector<16x128xi32>
      %c10_i32 = arith.constant 10 : i32
      %80 = vector.broadcast %c10_i32 : i32 to vector<16x128xi32>
      %81 = arith.cmpi slt, %79, %80 : vector<16x128xi32>
      %cst_46 = arith.constant 0.000000e+00 : f32
      %82 = vector.broadcast %cst_46 : f32 to vector<16x128xf32>
      %83 = arith.select %81, %78, %82 : vector<16x128xi1>, vector<16x128xf32>
      %c0_47 = arith.constant 0 : index
      %c0_48 = arith.constant 0 : index
      %84 = vector.load %arg16[%c0_47, %c0_48] : memref<16x128xf32, #tpu.memory_space<vmem>>, vector<16x128xf32>
      tpu.vector_store %arg16[%c0_47, %c0_48], %83 {strides = array<i32>} : memref<16x128xf32, #tpu.memory_space<vmem>>, vector<16x128xf32>,
    } else {
    }
    return
  }
  func.func @transform_0(%arg0: i32, %arg1: memref<24xi32, #tpu.memory_space<smem>>, %arg2: memref<24xi32, #tpu.memory_space<smem>>) -> (i32, i32) {
    %c0_i32 = arith.constant 0 : i32
    %c0_i32_0 = arith.constant 0 : i32
    return %arg0, %c0_i32 : i32, i32
  }
  func.func @transform_1(%arg0: i32, %arg1: memref<24xi32, #tpu.memory_space<smem>>, %arg2: memref<24xi32, #tpu.memory_space<smem>>) -> (i32, i32) {
    %c0_i32 = arith.constant 0 : i32
    %c0_i32_0 = arith.constant 0 : i32
    %c0_i32_1 = arith.constant 0 : i32
    return %c0_i32, %c0_i32_0 : i32, i32
  }
  func.func @transform_2(%arg0: i32, %arg1: memref<24xi32, #tpu.memory_space<smem>>, %arg2: memref<24xi32, #tpu.memory_space<smem>>) -> (i32, i32) {
    %c0_i32 = arith.constant 0 : i32
    %c0_i32_0 = arith.constant 0 : i32
    %c0_i32_1 = arith.constant 0 : i32
    return %c0_i32, %c0_i32_0 : i32, i32
  }
  func.func @transform_3(%arg0: i32, %arg1: memref<24xi32, #tpu.memory_space<smem>>, %arg2: memref<24xi32, #tpu.memory_space<smem>>) -> (i32, i32) {
    %c0_i32 = arith.constant 0 : i32
    %c0_i32_0 = arith.constant 0 : i32
    %c0_i32_1 = arith.constant 0 : i32
    return %c0_i32, %c0_i32_0 : i32, i32
  }
  func.func @transform_4(%arg0: i32, %arg1: memref<24xi32, #tpu.memory_space<smem>>, %arg2: memref<24xi32, #tpu.memory_space<smem>>) -> (i32, i32) {
    %c0_i32 = arith.constant 0 : i32
    %c0_i32_0 = arith.constant 0 : i32
    %c0_i32_1 = arith.constant 0 : i32
    return %c0_i32, %c0_i32_0 : i32, i32
  }
  func.func @transform_5(%arg0: i32, %arg1: memref<24xi32, #tpu.memory_space<smem>>, %arg2: memref<24xi32, #tpu.memory_space<smem>>) -> (i32, i32) {
    %c0_i32 = arith.constant 0 : i32
    %c0_i32_0 = arith.constant 0 : i32
    %c0_i32_1 = arith.constant 0 : i32
    return %c0_i32, %c0_i32_0 : i32, i32
  }
  func.func @transform_6(%arg0: i32, %arg1: memref<24xi32, #tpu.memory_space<smem>>, %arg2: memref<24xi32, #tpu.memory_space<smem>>) -> (i32, i32) {
    %c0_i32 = arith.constant 0 : i32
    %c0_i32_0 = arith.constant 0 : i32
    %c0_i32_1 = arith.constant 0 : i32
    return %c0_i32, %c0_i32_0 : i32, i32
  }
  func.func @transform_7(%arg0: i32, %arg1: memref<24xi32, #tpu.memory_space<smem>>, %arg2: memref<24xi32, #tpu.memory_space<smem>>) -> (i32, i32) {
    %c0_i32 = arith.constant 0 : i32
    %c0_i32_0 = arith.constant 0 : i32
    %c0_i32_1 = arith.constant 0 : i32
    return %c0_i32, %c0_i32_0 : i32, i32
  }
  func.func @transform_8(%arg0: i32, %arg1: memref<24xi32, #tpu.memory_space<smem>>, %arg2: memref<24xi32, #tpu.memory_space<smem>>) -> (i32, i32) {
    %c0_i32 = arith.constant 0 : i32
    %c0_i32_0 = arith.constant 0 : i32
    %c0_i32_1 = arith.constant 0 : i32
    return %c0_i32, %c0_i32_0 : i32, i32
  }
  func.func @transform_9(%arg0: i32, %arg1: memref<24xi32, #tpu.memory_space<smem>>, %arg2: memref<24xi32, #tpu.memory_space<smem>>) -> (i32, i32) {
    %c0_i32 = arith.constant 0 : i32
    %c0_i32_0 = arith.constant 0 : i32
    %c0_i32_1 = arith.constant 0 : i32
    return %c0_i32, %c0_i32_0 : i32, i32
  }
  func.func @transform_10(%arg0: i32, %arg1: memref<24xi32, #tpu.memory_space<smem>>, %arg2: memref<24xi32, #tpu.memory_space<smem>>) -> (i32, i32) {
    %c0_i32 = arith.constant 0 : i32
    %c0_i32_0 = arith.constant 0 : i32
    %c0_i32_1 = arith.constant 0 : i32
    return %c0_i32, %c0_i32_0 : i32, i32
  }
  func.func @transform_11(%arg0: i32, %arg1: memref<24xi32, #tpu.memory_space<smem>>, %arg2: memref<24xi32, #tpu.memory_space<smem>>) -> (i32, i32) {
    %c0_i32 = arith.constant 0 : i32
    %c0_i32_0 = arith.constant 0 : i32
    %c0_i32_1 = arith.constant 0 : i32
    return %c0_i32, %c0_i32_0 : i32, i32
  }
  func.func @transform_12(%arg0: i32, %arg1: memref<24xi32, #tpu.memory_space<smem>>, %arg2: memref<24xi32, #tpu.memory_space<smem>>) -> (i32, i32) {
    %c0_i32 = arith.constant 0 : i32
    %c0_i32_0 = arith.constant 0 : i32
    %c0_i32_1 = arith.constant 0 : i32
    return %c0_i32, %c0_i32_0 : i32, i32
  }
  func.func @transform_13(%arg0: i32, %arg1: memref<24xi32, #tpu.memory_space<smem>>, %arg2: memref<24xi32, #tpu.memory_space<smem>>) -> (i32, i32) {
    %c0_i32 = arith.constant 0 : i32
    %c0_i32_0 = arith.constant 0 : i32
    %c0_i32_1 = arith.constant 0 : i32
    return %c0_i32, %c0_i32_0 : i32, i32
  }
}

</mosaic_0001>

<llo_original>
// kernel: tpu_custom_call.1
$region0: #{tpu_custom_call.1}
  #allocation0 [shape = 'u32[]', space=smem, size = 0x4, offset = 0x4, fixed_abs, tag = 'smem constant byte address 0x4 - core index']
  #allocation1 [shape = 'u32[144,128]{1,0:T(1,128)}', space=vmem, size = 0x12000, scoped, tag = 'internal scratch']
  #allocation2 [shape = 'f32[16,128]{1,0:T(8,128)}', space=vmem, size = 0x2000, scoped, tag = 'scratch operand']
  #allocation3 [shape = 'f32[16,128]{1,0:T(8,128)}', space=vmem, size = 0x2000, scoped, tag = 'scratch operand']
  #allocation4 [shape = 'f32[8,128]{1,0:T(8,128)}', space=vmem, size = 0x1000, scoped, tag = 'scratch operand']
  #allocation5 [shape = 's32[1]{0}', space=sflag, size = 0x4, scoped, tag = 'scoped memory for tpu_custom_call.1']
  #allocation6 [shape = 'u8[512]{0}', space=smem, size = 0x200, scoped, tag = 'prefetched SMEM operand 0']
  #allocation7 [shape = 'u8[512]{0}', space=smem, size = 0x200, scoped, tag = 'prefetched SMEM operand 1']
  %s0 = inlined_call_operand.vmem [shape: s32[24], index: 0, kind: input, shape index: {}]
  %s1 = inlined_call_operand.vmem [shape: s32[24], index: 1, kind: input, shape index: {}]
  %s2 = inlined_call_operand.vmem [shape: f32[24,1], index: 2, kind: input, shape index: {}]
  %s3 = inlined_call_operand.vmem [shape: f32[16,128], index: 3, kind: input, shape index: {}]
  %s4 = inlined_call_operand.vmem [shape: f32[1,128], index: 4, kind: input, shape index: {}]
  %s5 = inlined_call_operand.hbm [shape: f32[128,128], index: 5, kind: input, shape index: {}]
  %s6 = inlined_call_operand.vmem [shape: f32[1,128], index: 6, kind: input, shape index: {}]
  %s7 = inlined_call_operand.hbm [shape: f32[128,128], index: 7, kind: input, shape index: {}]
  %s8 = inlined_call_operand.vmem [shape: f32[1,128], index: 8, kind: input, shape index: {}]
  %s9 = inlined_call_operand.hbm [shape: f32[128,128], index: 9, kind: input, shape index: {}]
  %s10 = inlined_call_operand.vmem [shape: f32[1,128], index: 10, kind: input, shape index: {}]
  %s11 = inlined_call_operand.hbm [shape: f32[128,128], index: 11, kind: input, shape index: {}]
  %s12 = inlined_call_operand.vmem [shape: f32[1,128], index: 12, kind: input, shape index: {}]
  %s13 = inlined_call_operand.hbm [shape: f32[128,128], index: 13, kind: input, shape index: {}]
  %s14 = inlined_call_operand.vmem [shape: f32[1,128], index: 14, kind: input, shape index: {}]
  %s15 = inlined_call_operand.hbm [shape: f32[16,128], index: 15, kind: output, shape index: {}]
  %s16 = sld [smem:[#allocation0]]
  $region120: #{tpu_custom_call.1} parent=0
    _
  %s18 = ssub.s32 1, %s16
  %s19 = scalar_select 0, %s18, %s16
  %s20 = sshll.u32 %s0, 4
  %s21 = int_to_ptr.vmem [resolvable:$true] %s20
  %23 = dma.vmem_to_smem %s21, 16, [#allocation6], [#allocation5]
  %s24 = sshll.u32 %s1, 4
  %s25 = int_to_ptr.vmem [resolvable:$true] %s24
  %27 = dma.vmem_to_smem %s25, 16, [#allocation7], [#allocation5]
  %28 = dma.done [#allocation5], 32
  %29 = sfence
  $region1: #{tpu_custom_call.1} parent=0
    #allocation8 [shape = 'u8[65536]{0}', space=vmem, size = 0x10000, scoped, tag = 'input window, operand 5, single buffered']
    #allocation9 [shape = 's32[2]{0}', space=sflag, size = 0x8, scoped, tag = 'scoped memory for tpu_custom_call.1']
    #allocation10 [shape = 's32[2]{0}', space=sflag, size = 0x8, scoped, tag = 'scoped memory for tpu_custom_call.1']
    #allocation11 [shape = 'u8[65536]{0}', space=vmem, size = 0x10000, scoped, tag = 'input window, operand 7, single buffered']
    #allocation12 [shape = 's32[1]{0}', space=sflag, size = 0x4, scoped, tag = 'scoped memory for tpu_custom_call.1']
    #allocation13 [shape = 'u8[65536]{0}', space=vmem, size = 0x10000, scoped, tag = 'input window, operand 9, single buffered']
    #allocation14 [shape = 'u8[65536]{0}', space=vmem, size = 0x10000, scoped, tag = 'input window, operand 11, single buffered']
    #allocation15 [shape = 's32[1]{0}', space=sflag, size = 0x4, scoped, tag = 'scoped memory for tpu_custom_call.1']
    #allocation16 [shape = 'u8[65536]{0}', space=vmem, size = 0x10000, scoped, tag = 'input window, operand 13, single buffered']
    #allocation17 [shape = 'u8[8192]{0}', space=vmem, size = 0x2000, scoped, tag = 'output window, operand 0, single buffered']
    %30 = vsyncpa [#allocation9], 0
    %31 = vsyncpa [#allocation12], 0
    %32 = vsyncpa [#allocation15], 0
    %33 = vsyncpa [#allocation10], 0
    loop: start=0, step=1, limit=5
    $region2: #{tpu_custom_call.1} parent=1 // loop_pre_header
      _
    $region3: #{tpu_custom_call.1} parent=1 // loop_header
      %s35 = sphi 0, %s39
      %p36 = scmp.ge.s32.totalorder %s35, 5
      %s45 = sphi 0, %s47
      %s48 = sphi 0, %s45
      %s49 = sphi 0, %s48
      %s65 = sphi 0, %s49
      %s69 = sphi 0, %s69
      %s71 = sphi 0, %s69
      %s72 = sphi 0, %s71
      %s86 = sphi 0, %s72
      %s90 = sphi 0, %s90
      %s92 = sphi 0, %s90
      %s93 = sphi 0, %s92
      %s107 = sphi 0, %s93
      %s111 = sphi 0, %s111
      %s113 = sphi 0, %s111
      %s114 = sphi 0, %s113
      %s128 = sphi 0, %s114
      %s132 = sphi 0, %s132
      %s134 = sphi 0, %s132
      %s135 = sphi 0, %s134
      %s149 = sphi 0, %s135
      %s153 = sphi 0, %s153
      %s155 = sphi 0, %s153
      %s156 = sphi 0, %s155
      %s170 = sphi 0, %s156
      %s174 = sphi 0, %s174
      %s176 = sphi 0, %s174
      %s177 = sphi 0, %s176
      %s191 = sphi 0, %s177
      %s195 = sphi 0, %s195
      %s197 = sphi 0, %s195
      %s198 = sphi 0, %s197
      %s212 = sphi 0, %s198
      %s216 = sphi 0, %s216
      %s218 = sphi 0, %s216
      %s219 = sphi 0, %s218
      %s233 = sphi 0, %s219
      %s237 = sphi 0, %s237
      %s239 = sphi 0, %s237
      %s240 = sphi 0, %s239
      %s254 = sphi 0, %s240
      %s258 = sphi 0, %s258
      %s260 = sphi 0, %s258
      %s261 = sphi 0, %s260
      %s275 = sphi 0, %s261
      %s279 = sphi 0, %s279
      %s281 = sphi 0, %s279
      %s282 = sphi 0, %s281
      %s296 = sphi 0, %s282
      %s300 = sphi 0, %s300
      %s302 = sphi 0, %s300
      %s303 = sphi 0, %s302
      %s317 = sphi 0, %s303
      %s321 = sphi 0, %s321
      %s323 = sphi 0, %s321
      %s324 = sphi 0, %s323
      %s338 = sphi 0, %s324
    $region4: #{tpu_custom_call.1} parent=1 // loop_header_branch
      %38 = sbr.rel (%p36) target = $region8
    $region5: #{tpu_custom_call.1} parent=1 // loop_body
      %s40 = ssub.s32 %s35, 1
      %s41 = ssub.s32 %s35, 2
      %s42 = sadd.s32 %s35, 1
      %s43 = ssub.s32 %s35, %s42
      %p44 = scmp.eq.s32.totalorder %s43, 0
      %s46 = sadd.s32 %s45, 1
      %s47 = scalar_select %p44, %s45, %s46
      %p50 = pneg %p44
      %p51 = scmp.eq.s32.totalorder %s35, 2
      %p52 = por %p50, %p51
      %p53 = scmp.ne.s32.totalorder %s45, %s48
      %p54 = scmp.eq.s32.totalorder %s35, 0
      %p55 = por %p53, %p54
      %p56 = scmp.ne.s32.totalorder %s45, %s48
      %p57 = scmp.eq.s32.totalorder %s40, 2
      %p58 = por %p56, %p57
      %p59 = scmp.ne.s32.totalorder %s48, %s49
      %p60 = scmp.eq.s32.totalorder %s40, 0
      %p61 = por %p59, %p60
      %p62 = scmp.ne.s32.totalorder %s48, %s49
      %p63 = scmp.eq.s32.totalorder %s41, 2
      %p64 = por %p62, %p63
      %p66 = scmp.ne.s32.totalorder %s49, %s65
      %p67 = scmp.eq.s32.totalorder %s41, 0
      %p68 = por %p66, %p67
      %s70 = sadd.s32 %s69, 1
      %p73 = scmp.eq.s32.totalorder %s35, 2
      %p74 = scmp.ne.s32.totalorder %s69, %s71
      %p75 = scmp.eq.s32.totalorder %s35, 0
      %p76 = por %p74, %p75
      %p77 = scmp.ne.s32.totalorder %s69, %s71
      %p78 = scmp.eq.s32.totalorder %s40, 2
      %p79 = por %p77, %p78
      %p80 = scmp.ne.s32.totalorder %s71, %s72
      %p81 = scmp.eq.s32.totalorder %s40, 0
      %p82 = por %p80, %p81
      %p83 = scmp.ne.s32.totalorder %s71, %s72
      %p84 = scmp.eq.s32.totalorder %s41, 2
      %p85 = por %p83, %p84
      %p87 = scmp.ne.s32.totalorder %s72, %s86
      %p88 = scmp.eq.s32.totalorder %s41, 0
      %p89 = por %p87, %p88
      %s91 = sadd.s32 %s90, 1
      %p94 = scmp.eq.s32.totalorder %s35, 2
      %p95 = scmp.ne.s32.totalorder %s90, %s92
      %p96 = scmp.eq.s32.totalorder %s35, 0
      %p97 = por %p95, %p96
      %p98 = scmp.ne.s32.totalorder %s90, %s92
      %p99 = scmp.eq.s32.totalorder %s40, 2
      %p100 = por %p98, %p99
      %p101 = scmp.ne.s32.totalorder %s92, %s93
      %p102 = scmp.eq.s32.totalorder %s40, 0
      %p103 = por %p101, %p102
      %p104 = scmp.ne.s32.totalorder %s92, %s93
      %p105 = scmp.eq.s32.totalorder %s41, 2
      %p106 = por %p104, %p105
      %p108 = scmp.ne.s32.totalorder %s93, %s107
      %p109 = scmp.eq.s32.totalorder %s41, 0
      %p110 = por %p108, %p109
      %s112 = sadd.s32 %s111, 1
      %p115 = scmp.eq.s32.totalorder %s35, 2
      %p116 = scmp.ne.s32.totalorder %s111, %s113
      %p117 = scmp.eq.s32.totalorder %s35, 0
      %p118 = por %p116, %p117
      %p119 = scmp.ne.s32.totalorder %s111, %s113
      %p120 = scmp.eq.s32.totalorder %s40, 2
      %p121 = por %p119, %p120
      %p122 = scmp.ne.s32.totalorder %s113, %s114
      %p123 = scmp.eq.s32.totalorder %s40, 0
      %p124 = por %p122, %p123
      %p125 = scmp.ne.s32.totalorder %s113, %s114
      %p126 = scmp.eq.s32.totalorder %s41, 2
      %p127 = por %p125, %p126
      %p129 = scmp.ne.s32.totalorder %s114, %s128
      %p130 = scmp.eq.s32.totalorder %s41, 0
      %p131 = por %p129, %p130
      %s133 = sadd.s32 %s132, 1
      %p136 = scmp.eq.s32.totalorder %s35, 2
      %p137 = scmp.ne.s32.totalorder %s132, %s134
      %p138 = scmp.eq.s32.totalorder %s35, 0
      %p139 = por %p137, %p138
      %p140 = scmp.ne.s32.totalorder %s132, %s134
      %p141 = scmp.eq.s32.totalorder %s40, 2
      %p142 = por %p140, %p141
      %p143 = scmp.ne.s32.totalorder %s134, %s135
      %p144 = scmp.eq.s32.totalorder %s40, 0
      %p145 = por %p143, %p144
      %p146 = scmp.ne.s32.totalorder %s134, %s135
      %p147 = scmp.eq.s32.totalorder %s41, 2
      %p148 = por %p146, %p147
      %p150 = scmp.ne.s32.totalorder %s135, %s149
      %p151 = scmp.eq.s32.totalorder %s41, 0
      %p152 = por %p150, %p151
      %s154 = sadd.s32 %s153, 1
      %p157 = scmp.eq.s32.totalorder %s35, 2
      %p158 = scmp.ne.s32.totalorder %s153, %s155
      %p159 = scmp.eq.s32.totalorder %s35, 0
      %p160 = por %p158, %p159
      %p161 = scmp.ne.s32.totalorder %s153, %s155
      %p162 = scmp.eq.s32.totalorder %s40, 2
      %p163 = por %p161, %p162
      %p164 = scmp.ne.s32.totalorder %s155, %s156
      %p165 = scmp.eq.s32.totalorder %s40, 0
      %p166 = por %p164, %p165
      %p167 = scmp.ne.s32.totalorder %s155, %s156
      %p168 = scmp.eq.s32.totalorder %s41, 2
      %p169 = por %p167, %p168
      %p171 = scmp.ne.s32.totalorder %s156, %s170
      %p172 = scmp.eq.s32.totalorder %s41, 0
      %p173 = por %p171, %p172
      %s175 = sadd.s32 %s174, 1
      %p178 = scmp.eq.s32.totalorder %s35, 2
      %p179 = scmp.ne.s32.totalorder %s174, %s176
      %p180 = scmp.eq.s32.totalorder %s35, 0
      %p181 = por %p179, %p180
      %p182 = scmp.ne.s32.totalorder %s174, %s176
      %p183 = scmp.eq.s32.totalorder %s40, 2
      %p184 = por %p182, %p183
      %p185 = scmp.ne.s32.totalorder %s176, %s177
      %p186 = scmp.eq.s32.totalorder %s40, 0
      %p187 = por %p185, %p186
      %p188 = scmp.ne.s32.totalorder %s176, %s177
      %p189 = scmp.eq.s32.totalorder %s41, 2
      %p190 = por %p188, %p189
      %p192 = scmp.ne.s32.totalorder %s177, %s191
      %p193 = scmp.eq.s32.totalorder %s41, 0
      %p194 = por %p192, %p193
      %s196 = sadd.s32 %s195, 1
      %p199 = scmp.eq.s32.totalorder %s35, 2
      %p200 = scmp.ne.s32.totalorder %s195, %s197
      %p201 = scmp.eq.s32.totalorder %s35, 0
      %p202 = por %p200, %p201
      %p203 = scmp.ne.s32.totalorder %s195, %s197
      %p204 = scmp.eq.s32.totalorder %s40, 2
      %p205 = por %p203, %p204
      %p206 = scmp.ne.s32.totalorder %s197, %s198
      %p207 = scmp.eq.s32.totalorder %s40, 0
      %p208 = por %p206, %p207
      %p209 = scmp.ne.s32.totalorder %s197, %s198
      %p210 = scmp.eq.s32.totalorder %s41, 2
      %p211 = por %p209, %p210
      %p213 = scmp.ne.s32.totalorder %s198, %s212
      %p214 = scmp.eq.s32.totalorder %s41, 0
      %p215 = por %p213, %p214
      %s217 = sadd.s32 %s216, 1
      %p220 = scmp.eq.s32.totalorder %s35, 2
      %p221 = scmp.ne.s32.totalorder %s216, %s218
      %p222 = scmp.eq.s32.totalorder %s35, 0
      %p223 = por %p221, %p222
      %p224 = scmp.ne.s32.totalorder %s216, %s218
      %p225 = scmp.eq.s32.totalorder %s40, 2
      %p226 = por %p224, %p225
      %p227 = scmp.ne.s32.totalorder %s218, %s219
      %p228 = scmp.eq.s32.totalorder %s40, 0
      %p229 = por %p227, %p228
      %p230 = scmp.ne.s32.totalorder %s218, %s219
      %p231 = scmp.eq.s32.totalorder %s41, 2
      %p232 = por %p230, %p231
      %p234 = scmp.ne.s32.totalorder %s219, %s233
      %p235 = scmp.eq.s32.totalorder %s41, 0
      %p236 = por %p234, %p235
      %s238 = sadd.s32 %s237, 1
      %p241 = scmp.eq.s32.totalorder %s35, 2
      %p242 = scmp.ne.s32.totalorder %s237, %s239
      %p243 = scmp.eq.s32.totalorder %s35, 0
      %p244 = por %p242, %p243
      %p245 = scmp.ne.s32.totalorder %s237, %s239
      %p246 = scmp.eq.s32.totalorder %s40, 2
      %p247 = por %p245, %p246
      %p248 = scmp.ne.s32.totalorder %s239, %s240
      %p249 = scmp.eq.s32.totalorder %s40, 0
      %p250 = por %p248, %p249
      %p251 = scmp.ne.s32.totalorder %s239, %s240
      %p252 = scmp.eq.s32.totalorder %s41, 2
      %p253 = por %p251, %p252
      %p255 = scmp.ne.s32.totalorder %s240, %s254
      %p256 = scmp.eq.s32.totalorder %s41, 0
      %p257 = por %p255, %p256
      %s259 = sadd.s32 %s258, 1
      %p262 = scmp.eq.s32.totalorder %s35, 2
      %p263 = scmp.ne.s32.totalorder %s258, %s260
      %p264 = scmp.eq.s32.totalorder %s35, 0
      %p265 = por %p263, %p264
      %p266 = scmp.ne.s32.totalorder %s258, %s260
      %p267 = scmp.eq.s32.totalorder %s40, 2
      %p268 = por %p266, %p267
      %p269 = scmp.ne.s32.totalorder %s260, %s261
      %p270 = scmp.eq.s32.totalorder %s40, 0
      %p271 = por %p269, %p270
      %p272 = scmp.ne.s32.totalorder %s260, %s261
      %p273 = scmp.eq.s32.totalorder %s41, 2
      %p274 = por %p272, %p273
      %p276 = scmp.ne.s32.totalorder %s261, %s275
      %p277 = scmp.eq.s32.totalorder %s41, 0
      %p278 = por %p276, %p277
      %s280 = sadd.s32 %s279, 1
      %p283 = scmp.eq.s32.totalorder %s35, 2
      %p284 = scmp.ne.s32.totalorder %s279, %s281
      %p285 = scmp.eq.s32.totalorder %s35, 0
      %p286 = por %p284, %p285
      %p287 = scmp.ne.s32.totalorder %s279, %s281
      %p288 = scmp.eq.s32.totalorder %s40, 2
      %p289 = por %p287, %p288
      %p290 = scmp.ne.s32.totalorder %s281, %s282
      %p291 = scmp.eq.s32.totalorder %s40, 0
      %p292 = por %p290, %p291
      %p293 = scmp.ne.s32.totalorder %s281, %s282
      %p294 = scmp.eq.s32.totalorder %s41, 2
      %p295 = por %p293, %p294
      %p297 = scmp.ne.s32.totalorder %s282, %s296
      %p298 = scmp.eq.s32.totalorder %s41, 0
      %p299 = por %p297, %p298
      %s301 = sadd.s32 %s300, 1
      %p304 = scmp.eq.s32.totalorder %s35, 2
      %p305 = scmp.ne.s32.totalorder %s300, %s302
      %p306 = scmp.eq.s32.totalorder %s35, 0
      %p307 = por %p305, %p306
      %p308 = scmp.ne.s32.totalorder %s300, %s302
      %p309 = scmp.eq.s32.totalorder %s40, 2
      %p310 = por %p308, %p309
      %p311 = scmp.ne.s32.totalorder %s302, %s303
      %p312 = scmp.eq.s32.totalorder %s40, 0
      %p313 = por %p311, %p312
      %p314 = scmp.ne.s32.totalorder %s302, %s303
      %p315 = scmp.eq.s32.totalorder %s41, 2
      %p316 = por %p314, %p315
      %p318 = scmp.ne.s32.totalorder %s303, %s317
      %p319 = scmp.eq.s32.totalorder %s41, 0
      %p320 = por %p318, %p319
      %s322 = sadd.s32 %s321, 1
      %p325 = scmp.eq.s32.totalorder %s35, 2
      %p326 = scmp.ne.s32.totalorder %s321, %s323
      %p327 = scmp.eq.s32.totalorder %s35, 0
      %p328 = por %p326, %p327
      %p329 = scmp.ne.s32.totalorder %s321, %s323
      %p330 = scmp.eq.s32.totalorder %s40, 2
      %p331 = por %p329, %p330
      %p332 = scmp.ne.s32.totalorder %s323, %s324
      %p333 = scmp.eq.s32.totalorder %s40, 0
      %p334 = por %p332, %p333
      %p335 = scmp.ne.s32.totalorder %s323, %s324
      %p336 = scmp.eq.s32.totalorder %s41, 2
      %p337 = por %p335, %p336
      %p339 = scmp.ne.s32.totalorder %s324, %s338
      %p340 = scmp.eq.s32.totalorder %s41, 0
      %p341 = por %p339, %p340
      %p342 = scmp.le.s32.totalorder 1, %s35
      %p343 = scmp.lt.s32.totalorder %s35, 4
      %p344 = pnand %p342, %p343
      %p345 = pneg %p344
      // Predicated region
      $region9: #{tpu_custom_call.1} parent=5 // pred_check
        _
      $region10: #{tpu_custom_call.1} parent=5 // pred_check_branch
        %347 = sbr.rel (%p344) target = $region12
      $region11: #{tpu_custom_call.1} parent=5 // pred_region
        %s348 = ssub.s32 %s35, 1
        // Predicated region
        $region13: #{tpu_custom_call.1} parent=11 // pred_check
          %p349 = pneg %p82
        $region14: #{tpu_custom_call.1} parent=11 // pred_check_branch
          %351 = sbr.rel (%p349) target = $region16
        $region15: #{tpu_custom_call.1} parent=11 // pred_region
          _
        $region16: #{tpu_custom_call.1} parent=11 // pred_fallthru
          _
        // Predicated region
        $region17: #{tpu_custom_call.1} parent=11 // pred_check
          %p352 = pneg %p103
        $region18: #{tpu_custom_call.1} parent=11 // pred_check_branch
          %354 = sbr.rel (%p352) target = $region20
        $region19: #{tpu_custom_call.1} parent=11 // pred_region
          _
        $region20: #{tpu_custom_call.1} parent=11 // pred_fallthru
          _
        // Predicated region
        $region21: #{tpu_custom_call.1} parent=11 // pred_check
          %p355 = pneg %p124
        $region22: #{tpu_custom_call.1} parent=11 // pred_check_branch
          %357 = sbr.rel (%p355) target = $region24
        $region23: #{tpu_custom_call.1} parent=11 // pred_region
          %s359 = ssub.s32 2048, 2048
          %360 = vsyncadd [#allocation9], %s359
          %s361 = sshll.u32 [#allocation8], 4
          %s362 = int_to_ptr.vmem [resolvable:$true] %s361
          %367 = dma.hbm_to_vmem [thread:$0]  %s5, 2048, %s362, [#allocation9], 128, 128, 8
        $region24: #{tpu_custom_call.1} parent=11 // pred_fallthru
          _
        // Predicated region
        $region25: #{tpu_custom_call.1} parent=11 // pred_check
          %p368 = pneg %p145
        $region26: #{tpu_custom_call.1} parent=11 // pred_check_branch
          %370 = sbr.rel (%p368) target = $region28
        $region27: #{tpu_custom_call.1} parent=11 // pred_region
          _
        $region28: #{tpu_custom_call.1} parent=11 // pred_fallthru
          _
        // Predicated region
        $region29: #{tpu_custom_call.1} parent=11 // pred_check
          %p371 = pneg %p166
        $region30: #{tpu_custom_call.1} parent=11 // pred_check_branch
          %373 = sbr.rel (%p371) target = $region32
        $region31: #{tpu_custom_call.1} parent=11 // pred_region
          %s375 = ssub.s32 2048, 2048
          %376 = vsyncadd [#allocation12], %s375
          %s377 = sshll.u32 [#allocation11], 4
          %s378 = int_to_ptr.vmem [resolvable:$true] %s377
          %383 = dma.hbm_to_vmem [thread:$0]  %s7, 2048, %s378, [#allocation12], 128, 128, 8
        $region32: #{tpu_custom_call.1} parent=11 // pred_fallthru
          _
        // Predicated region
        $region33: #{tpu_custom_call.1} parent=11 // pred_check
          %p384 = pneg %p187
        $region34: #{tpu_custom_call.1} parent=11 // pred_check_branch
          %386 = sbr.rel (%p384) target = $region36
        $region35: #{tpu_custom_call.1} parent=11 // pred_region
          _
        $region36: #{tpu_custom_call.1} parent=11 // pred_fallthru
          _
        // Predicated region
        $region37: #{tpu_custom_call.1} parent=11 // pred_check
          %p387 = pneg %p208
        $region38: #{tpu_custom_call.1} parent=11 // pred_check_branch
          %389 = sbr.rel (%p387) target = $region40
        $region39: #{tpu_custom_call.1} parent=11 // pred_region
          %s391 = ssub.s32 2048, 2048
          %392 = vsyncadd [#allocation12], %s391
          %s393 = sshll.u32 [#allocation13], 4
          %s394 = int_to_ptr.vmem [resolvable:$true] %s393
          %399 = dma.hbm_to_vmem [thread:$0]  %s9, 2048, %s394, [#allocation12], 128, 128, 8
        $region40: #{tpu_custom_call.1} parent=11 // pred_fallthru
          _
        // Predicated region
        $region41: #{tpu_custom_call.1} parent=11 // pred_check
          %p400 = pneg %p229
        $region42: #{tpu_custom_call.1} parent=11 // pred_check_branch
          %402 = sbr.rel (%p400) target = $region44
        $region43: #{tpu_custom_call.1} parent=11 // pred_region
          _
        $region44: #{tpu_custom_call.1} parent=11 // pred_fallthru
          _
        // Predicated region
        $region45: #{tpu_custom_call.1} parent=11 // pred_check
          %p403 = pneg %p250
        $region46: #{tpu_custom_call.1} parent=11 // pred_check_branch
          %405 = sbr.rel (%p403) target = $region48
        $region47: #{tpu_custom_call.1} parent=11 // pred_region
          %s407 = ssub.s32 2048, 2048
          %408 = vsyncadd [#allocation15], %s407
          %s409 = sshll.u32 [#allocation14], 4
          %s410 = int_to_ptr.vmem [resolvable:$true] %s409
          %415 = dma.hbm_to_vmem [thread:$0]  %s11, 2048, %s410, [#allocation15], 128, 128, 8
        $region48: #{tpu_custom_call.1} parent=11 // pred_fallthru
          _
        // Predicated region
        $region49: #{tpu_custom_call.1} parent=11 // pred_check
          %p416 = pneg %p271
        $region50: #{tpu_custom_call.1} parent=11 // pred_check_branch
          %418 = sbr.rel (%p416) target = $region52
        $region51: #{tpu_custom_call.1} parent=11 // pred_region
          _
        $region52: #{tpu_custom_call.1} parent=11 // pred_fallthru
          _
        // Predicated region
        $region53: #{tpu_custom_call.1} parent=11 // pred_check
          %p419 = pneg %p292
        $region54: #{tpu_custom_call.1} parent=11 // pred_check_branch
          %421 = sbr.rel (%p419) target = $region56
        $region55: #{tpu_custom_call.1} parent=11 // pred_region
          %s423 = ssub.s32 2048, 2048
          %424 = vsyncadd [#allocation15], %s423
          %s425 = sshll.u32 [#allocation16], 4
          %s426 = int_to_ptr.vmem [resolvable:$true] %s425
          %431 = dma.hbm_to_vmem [thread:$0]  %s13, 2048, %s426, [#allocation15], 128, 128, 8
        $region56: #{tpu_custom_call.1} parent=11 // pred_fallthru
          _
        // Predicated region
        $region57: #{tpu_custom_call.1} parent=11 // pred_check
          %p432 = pneg %p313
        $region58: #{tpu_custom_call.1} parent=11 // pred_check_branch
          %434 = sbr.rel (%p432) target = $region60
        $region59: #{tpu_custom_call.1} parent=11 // pred_region
          _
        $region60: #{tpu_custom_call.1} parent=11 // pred_fallthru
          _
      $region12: #{tpu_custom_call.1} parent=5 // pred_fallthru
        _
      %p435 = scmp.lt.s32.totalorder %s35, 3
      // Predicated region
      $region61: #{tpu_custom_call.1} parent=5 // pred_check
        %p436 = pneg %p435
      $region62: #{tpu_custom_call.1} parent=5 // pred_check_branch
        %438 = sbr.rel (%p436) target = $region64
      $region63: #{tpu_custom_call.1} parent=5 // pred_region
        // Predicated region
        $region65: #{tpu_custom_call.1} parent=63 // pred_check
          %p439 = pneg %p55
        $region66: #{tpu_custom_call.1} parent=63 // pred_check_branch
          %441 = sbr.rel (%p439) target = $region68
        $region67: #{tpu_custom_call.1} parent=63 // pred_region
          %p442 = scmp.lt.s32.totalorder %s35, 2
          %s443 = scalar_select %p442, %s35, 2
          %s444 = smul.addr %s443, 8
          %s445 = scalar_lea.vmem %s2, %s444
        $region68: #{tpu_custom_call.1} parent=63 // pred_fallthru
          _
      $region64: #{tpu_custom_call.1} parent=5 // pred_fallthru
        _
      %p446 = scmp.le.s32.totalorder 1, %s35
      %p447 = scmp.lt.s32.totalorder %s35, 4
      %p448 = pnand %p446, %p447
      %p449 = pneg %p448
      // Predicated region
      $region69: #{tpu_custom_call.1} parent=5 // pred_check
        _
      $region70: #{tpu_custom_call.1} parent=5 // pred_check_branch
        %451 = sbr.rel (%p448) target = $region72
      $region71: #{tpu_custom_call.1} parent=5 // pred_region
        %s452 = ssub.s32 %s35, 1
        // Predicated region
        $region73: #{tpu_custom_call.1} parent=71 // pred_check
          %p453 = pneg %p124
        $region74: #{tpu_custom_call.1} parent=71 // pred_check_branch
          %455 = sbr.rel (%p453) target = $region76
        $region75: #{tpu_custom_call.1} parent=71 // pred_region
          %456 = dma.done [#allocation9], 2048
        $region76: #{tpu_custom_call.1} parent=71 // pred_fallthru
          _
        // Predicated region
        $region77: #{tpu_custom_call.1} parent=71 // pred_check
          %p457 = pneg %p166
        $region78: #{tpu_custom_call.1} parent=71 // pred_check_branch
          %459 = sbr.rel (%p457) target = $region80
        $region79: #{tpu_custom_call.1} parent=71 // pred_region
          %460 = dma.done [#allocation12], 2048
        $region80: #{tpu_custom_call.1} parent=71 // pred_fallthru
          _
        // Predicated region
        $region81: #{tpu_custom_call.1} parent=71 // pred_check
          %p461 = pneg %p208
        $region82: #{tpu_custom_call.1} parent=71 // pred_check_branch
          %463 = sbr.rel (%p461) target = $region84
        $region83: #{tpu_custom_call.1} parent=71 // pred_region
          %464 = dma.done [#allocation12], 2048
        $region84: #{tpu_custom_call.1} parent=71 // pred_fallthru
          _
        // Predicated region
        $region85: #{tpu_custom_call.1} parent=71 // pred_check
          %p465 = pneg %p250
        $region86: #{tpu_custom_call.1} parent=71 // pred_check_branch
          %467 = sbr.rel (%p465) target = $region88
        $region87: #{tpu_custom_call.1} parent=71 // pred_region
          %468 = dma.done [#allocation15], 2048
        $region88: #{tpu_custom_call.1} parent=71 // pred_fallthru
          _
        // Predicated region
        $region89: #{tpu_custom_call.1} parent=71 // pred_check
          %p469 = pneg %p292
        $region90: #{tpu_custom_call.1} parent=71 // pred_check_branch
          %471 = sbr.rel (%p469) target = $region92
        $region91: #{tpu_custom_call.1} parent=71 // pred_region
          %472 = dma.done [#allocation15], 2048
        $region92: #{tpu_custom_call.1} parent=71 // pred_fallthru
          _
        %p473 = scmp.lt.s32.totalorder %s40, 2
        %s474 = scalar_select %p473, %s40, 2
        %s475 = smul.addr %s474, 8
        %s476 = scalar_lea.vmem %s2, %s475
        %p477 = pneg %p61
        %p478 = pneg %p58
        %p479 = pneg %p82
        %p480 = pneg %p79
        %p481 = pneg %p103
        %p482 = pneg %p100
        %p483 = pneg %p124
        %p484 = pneg %p121
        %p485 = pneg %p145
        %p486 = pneg %p142
        %p487 = pneg %p166
        %p488 = pneg %p163
        %p489 = pneg %p187
        %p490 = pneg %p184
        %p491 = pneg %p208
        %p492 = pneg %p205
        %p493 = pneg %p229
        %p494 = pneg %p226
        %p495 = pneg %p250
        %p496 = pneg %p247
        %p497 = pneg %p271
        %p498 = pneg %p268
        %p499 = pneg %p292
        %p500 = pneg %p289
        %p501 = pneg %p313
        %p502 = pneg %p310
        %p503 = pneg %p334
        %p504 = pneg %p331
        %p505 = scmp.lt.s32.totalorder %s40, 2
        %s506 = scalar_select %p505, %s40, 2
        %s507 = smul.addr %s506, 8
        %s508 = scalar_lea.vmem %s2, %s507
        %p509 = scmp.eq.s32.totalorder %s40, 0
        // Predicated region
        $region93: #{tpu_custom_call.1} parent=71 // pred_check
          %p510 = pneg %p509
        $region94: #{tpu_custom_call.1} parent=71 // pred_check_branch
          %512 = sbr.rel (%p510) target = $region96
        $region95: #{tpu_custom_call.1} parent=71 // pred_region
          %v513 = vld [vmem:[%s3] sm:$0xff]
          %v514 = vld [vmem:[%s3 + $0x8] sm:$0xff]
          %v515 = vld [vmem:[#allocation8] sm:$0xff]
          %v516 = vld [vmem:[#allocation8 + $0x8] sm:$0xff]
          %v517 = vld [vmem:[#allocation8 + $0x10] sm:$0xff]
          %v518 = vld [vmem:[#allocation8 + $0x18] sm:$0xff]
          %v519 = vld [vmem:[#allocation8 + $0x20] sm:$0xff]
          %v520 = vld [vmem:[#allocation8 + $0x28] sm:$0xff]
          %v521 = vld [vmem:[#allocation8 + $0x30] sm:$0xff]
          %v522 = vld [vmem:[#allocation8 + $0x38] sm:$0xff]
          %v523 = vld [vmem:[#allocation8 + $0x40] sm:$0xff]
          %v524 = vld [vmem:[#allocation8 + $0x48] sm:$0xff]
          %v525 = vld [vmem:[#allocation8 + $0x50] sm:$0xff]
          %v526 = vld [vmem:[#allocation8 + $0x58] sm:$0xff]
          %v527 = vld [vmem:[#allocation8 + $0x60] sm:$0xff]
          %v528 = vld [vmem:[#allocation8 + $0x68] sm:$0xff]
          %v529 = vld [vmem:[#allocation8 + $0x70] sm:$0xff]
          %v530 = vld [vmem:[#allocation8 + $0x78] sm:$0xff]
          %v531 = vld [vmem:[%s6] sm:$0x1]
          %v533 = vlaneseq
          %v534 = vshrl.u32 %v533, 7
          %v535 = vsub.s32 0, %v534
          %v536 = vrot.slane %v531, %v535
          %538 = vmatprep.subr.mxu0 0.0
          %539 = vmatpush1.msra.mxu0 %v515
          %540 = vmatprep.subr.mxu0 0.0
          %541 = vmatpush1.msra.mxu0 %v516
          %542 = vmatprep.subr.mxu0 0.0
          %543 = vmatpush1.msra.mxu0 %v517
          %544 = vmatprep.subr.mxu0 0.0
          %545 = vmatpush1.msra.mxu0 %v518
          %546 = vmatprep.subr.mxu0 0.0
          %547 = vmatpush1.msra.mxu0 %v519
          %548 = vmatprep.subr.mxu0 0.0
          %549 = vmatpush1.msra.mxu0 %v520
          %550 = vmatprep.subr.mxu0 0.0
          %551 = vmatpush1.msra.mxu0 %v521
          %552 = vmatprep.subr.mxu0 0.0
          %553 = vmatpush1.msra.mxu0 %v522
          %554 = vmatprep.subr.mxu0 0.0
          %555 = vmatpush1.msra.mxu0 %v523
          %556 = vmatprep.subr.mxu0 0.0
          %557 = vmatpush1.msra.mxu0 %v524
          %558 = vmatprep.subr.mxu0 0.0
          %559 = vmatpush1.msra.mxu0 %v525
          %560 = vmatprep.subr.mxu0 0.0
          %561 = vmatpush1.msra.mxu0 %v526
          %562 = vmatprep.subr.mxu0 0.0
          %563 = vmatpush1.msra.mxu0 %v527
          %564 = vmatprep.subr.mxu0 0.0
          %565 = vmatpush1.msra.mxu0 %v528
          %566 = vmatprep.subr.mxu0 0.0
          %567 = vmatpush1.msra.mxu0 %v529
          %568 = vmatprep.subr.mxu0 0.0
          %569 = vmatpush1.msra.mxu0 %v530
          %570 = vmatprep.subr.mxu0 0.0
          %571 = vmatpush1.msra.mxu0 0.0
          %572 = vmatprep.subr.mxu0 0.0
          %573 = vmatpush1.msra.mxu0 0.0
          %574 = vmatprep.subr.mxu0 0.0
          %575 = vmatpush1.msra.mxu0 0.0
          %576 = vmatprep.subr.mxu0 0.0
          %577 = vmatpush1.msra.mxu0 0.0
          %578 = vmatprep.subr.mxu0 0.0
          %579 = vmatpush1.msra.mxu0 0.0
          %580 = vmatprep.subr.mxu0 0.0
          %581 = vmatpush1.msra.mxu0 0.0
          %582 = vmatprep.subr.mxu0 0.0
          %583 = vmatpush1.msra.mxu0 0.0
          %584 = vmatprep.subr.mxu0 0.0
          %585 = vmatpush1.msra.mxu0 0.0
          %586 = vmatprep.subr.mxu0 0.0
          %587 = vmatpush1.msra.mxu0 0.0
          %588 = vmatprep.subr.mxu0 0.0
          %589 = vmatpush1.msra.mxu0 0.0
          %590 = vmatprep.subr.mxu0 0.0
          %591 = vmatpush1.msra.mxu0 0.0
          %592 = vmatprep.subr.mxu0 0.0
          %593 = vmatpush1.msra.mxu0 0.0
          %594 = vmatprep.subr.mxu0 0.0
          %595 = vmatpush1.msra.mxu0 0.0
          %596 = vmatprep.subr.mxu0 0.0
          %597 = vmatpush1.msra.mxu0 0.0
          %598 = vmatprep.subr.mxu0 0.0
          %599 = vmatpush1.msra.mxu0 0.0
          %600 = vmatprep.subr.mxu0 0.0
          %601 = vmatpush1.msra.mxu0 0.0
          %602 = vmatprep.mubr.f32.mxu0 0.0
          %603 = vmatmul.mubr.f32.gmra.mrb[0].mxu0 %v513
          %v604 = vpop.f32.mrb[0].mxu0
          %v605 = vadd.f32 %v536, %v604
          %v606 = vpop.f32.mrb[0].mxu0
          %607 = vmatprep.mubr.f32.mxu0 0.0
          %608 = vmatmul.mubr.f32.gmra.mrb[0].mxu0 %v514
          %v609 = vpop.f32.mrb[0].mxu0
          %v610 = vadd.f32 %v536, %v609
          %v611 = vpop.f32.mrb[0].mxu0
          %612 = vdwg.mxu0
          %613 = vst [vmem:[#allocation2] sm:$0xff] %v605
          %614 = vst [vmem:[#allocation2 + $0x8] sm:$0xff] %v610
          %615 = vst [vmem:[#allocation3] sm:$0xff] 0.0
          %616 = vst [vmem:[#allocation3 + $0x8] sm:$0xff] 0.0
        $region96: #{tpu_custom_call.1} parent=71 // pred_fallthru
          _
        %v617 = vld [vmem:[%s508] sm:$0xff]
        %v618 = vld [vmem:[%s4] sm:$0x1]
        %620 = vset.pattern.permute.xlu0 0
        %621 = vperm.xlu0 %620, %v617
        %v622 = vpop.permute.xlu0 %621
        %v625 = vlaneseq
        %v626 = vshrl.u32 %v625, 7
        %v627 = vsub.s32 0, %v626
        %v628 = vrot.slane %v618, %v627
        %v630 = vsub.f32 %v622, %v628
        %v631 = vmul.f32 %v630, -2.0
        %v632 = vmul.f32 %v631, %v630
        %v633 = vmul.f32 %v632, 1.442695
        %v634 = vpow.pop %v633
        %v635 = vld [vmem:[#allocation11] sm:$0xff]
        %v636 = vld [vmem:[#allocation11 + $0x8] sm:$0xff]
        %v637 = vld [vmem:[#allocation11 + $0x10] sm:$0xff]
        %v638 = vld [vmem:[#allocation11 + $0x18] sm:$0xff]
        %v639 = vld [vmem:[#allocation11 + $0x20] sm:$0xff]
        %v640 = vld [vmem:[#allocation11 + $0x28] sm:$0xff]
        %v641 = vld [vmem:[#allocation11 + $0x30] sm:$0xff]
        %v642 = vld [vmem:[#allocation11 + $0x38] sm:$0xff]
        %v643 = vld [vmem:[#allocation11 + $0x40] sm:$0xff]
        %v644 = vld [vmem:[#allocation11 + $0x48] sm:$0xff]
        %v645 = vld [vmem:[#allocation11 + $0x50] sm:$0xff]
        %v646 = vld [vmem:[#allocation11 + $0x58] sm:$0xff]
        %v647 = vld [vmem:[#allocation11 + $0x60] sm:$0xff]
        %v648 = vld [vmem:[#allocation11 + $0x68] sm:$0xff]
        %v649 = vld [vmem:[#allocation11 + $0x70] sm:$0xff]
        %v650 = vld [vmem:[#allocation11 + $0x78] sm:$0xff]
        %v651 = vld [vmem:[%s8] sm:$0x1]
        %v653 = vlaneseq
        %v654 = vshrl.u32 %v653, 7
        %v655 = vsub.s32 0, %v654
        %v656 = vrot.slane %v651, %v655
        %658 = vmatprep.subr.mxu0 0.0
        %659 = vmatpush1.msra.mxu0 %v635
        %660 = vmatprep.subr.mxu0 0.0
        %661 = vmatpush1.msra.mxu0 %v636
        %662 = vmatprep.subr.mxu0 0.0
        %663 = vmatpush1.msra.mxu0 %v637
        %664 = vmatprep.subr.mxu0 0.0
        %665 = vmatpush1.msra.mxu0 %v638
        %666 = vmatprep.subr.mxu0 0.0
        %667 = vmatpush1.msra.mxu0 %v639
        %668 = vmatprep.subr.mxu0 0.0
        %669 = vmatpush1.msra.mxu0 %v640
        %670 = vmatprep.subr.mxu0 0.0
        %671 = vmatpush1.msra.mxu0 %v641
        %672 = vmatprep.subr.mxu0 0.0
        %673 = vmatpush1.msra.mxu0 %v642
        %674 = vmatprep.subr.mxu0 0.0
        %675 = vmatpush1.msra.mxu0 %v643
        %676 = vmatprep.subr.mxu0 0.0
        %677 = vmatpush1.msra.mxu0 %v644
        %678 = vmatprep.subr.mxu0 0.0
        %679 = vmatpush1.msra.mxu0 %v645
        %680 = vmatprep.subr.mxu0 0.0
        %681 = vmatpush1.msra.mxu0 %v646
        %682 = vmatprep.subr.mxu0 0.0
        %683 = vmatpush1.msra.mxu0 %v647
        %684 = vmatprep.subr.mxu0 0.0
        %685 = vmatpush1.msra.mxu0 %v648
        %686 = vmatprep.subr.mxu0 0.0
        %687 = vmatpush1.msra.mxu0 %v649
        %688 = vmatprep.subr.mxu0 0.0
        %689 = vmatpush1.msra.mxu0 %v650
        %690 = vmatprep.subr.mxu0 0.0
        %691 = vmatpush1.msra.mxu0 0.0
        %692 = vmatprep.subr.mxu0 0.0
        %693 = vmatpush1.msra.mxu0 0.0
        %694 = vmatprep.subr.mxu0 0.0
        %695 = vmatpush1.msra.mxu0 0.0
        %696 = vmatprep.subr.mxu0 0.0
        %697 = vmatpush1.msra.mxu0 0.0
        %698 = vmatprep.subr.mxu0 0.0
        %699 = vmatpush1.msra.mxu0 0.0
        %700 = vmatprep.subr.mxu0 0.0
        %701 = vmatpush1.msra.mxu0 0.0
        %702 = vmatprep.subr.mxu0 0.0
        %703 = vmatpush1.msra.mxu0 0.0
        %704 = vmatprep.subr.mxu0 0.0
        %705 = vmatpush1.msra.mxu0 0.0
        %706 = vmatprep.subr.mxu0 0.0
        %707 = vmatpush1.msra.mxu0 0.0
        %708 = vmatprep.subr.mxu0 0.0
        %709 = vmatpush1.msra.mxu0 0.0
        %710 = vmatprep.subr.mxu0 0.0
        %711 = vmatpush1.msra.mxu0 0.0
        %712 = vmatprep.subr.mxu0 0.0
        %713 = vmatpush1.msra.mxu0 0.0
        %714 = vmatprep.subr.mxu0 0.0
        %715 = vmatpush1.msra.mxu0 0.0
        %716 = vmatprep.subr.mxu0 0.0
        %717 = vmatpush1.msra.mxu0 0.0
        %718 = vmatprep.subr.mxu0 0.0
        %719 = vmatpush1.msra.mxu0 0.0
        %720 = vmatprep.subr.mxu0 0.0
        %721 = vmatpush1.msra.mxu0 0.0
        %722 = vmatprep.mubr.f32.mxu0 0.0
        %723 = vmatmul.mubr.f32.gmra.mrb[0].mxu0 %v634
        %v724 = vpop.f32.mrb[0].mxu0
        %v725 = vadd.f32 %v656, %v724
        %v726 = vpop.f32.mrb[0].mxu0
        %727 = vdwg.mxu0
        %v728 = vmax.f32 %v725, 0.0
        %v729 = vand.u32 2147483647, %v725
        %v730 = vsub.f32 0.0, %v729
        %v731 = vmul.f32 %v730, 1.442695
        %v732 = vpow.pop %v731
        %v733 = vadd.f32 %v732, 1.0
        %v734 = vlog2.pop %v733
        %v735 = vmul.f32 %v734, 0.6931472
        %v736 = vadd.f32 %v728, %v735
        %v737 = vsub.f32 %v736, 0.6931472
        %v738 = vld [vmem:[#allocation13] sm:$0xff]
        %v739 = vld [vmem:[#allocation13 + $0x8] sm:$0xff]
        %v740 = vld [vmem:[#allocation13 + $0x10] sm:$0xff]
        %v741 = vld [vmem:[#allocation13 + $0x18] sm:$0xff]
        %v742 = vld [vmem:[#allocation13 + $0x20] sm:$0xff]
        %v743 = vld [vmem:[#allocation13 + $0x28] sm:$0xff]
        %v744 = vld [vmem:[#allocation13 + $0x30] sm:$0xff]
        %v745 = vld [vmem:[#allocation13 + $0x38] sm:$0xff]
        %v746 = vld [vmem:[#allocation13 + $0x40] sm:$0xff]
        %v747 = vld [vmem:[#allocation13 + $0x48] sm:$0xff]
        %v748 = vld [vmem:[#allocation13 + $0x50] sm:$0xff]
        %v749 = vld [vmem:[#allocation13 + $0x58] sm:$0xff]
        %v750 = vld [vmem:[#allocation13 + $0x60] sm:$0xff]
        %v751 = vld [vmem:[#allocation13 + $0x68] sm:$0xff]
        %v752 = vld [vmem:[#allocation13 + $0x70] sm:$0xff]
        %v753 = vld [vmem:[#allocation13 + $0x78] sm:$0xff]
        %v754 = vld [vmem:[%s10] sm:$0x1]
        %v756 = vlaneseq
        %v757 = vshrl.u32 %v756, 7
        %v758 = vsub.s32 0, %v757
        %v759 = vrot.slane %v754, %v758
        %761 = vmatprep.subr.mxu0 0.0
        %762 = vmatpush1.msra.mxu0 %v738
        %763 = vmatprep.subr.mxu0 0.0
        %764 = vmatpush1.msra.mxu0 %v739
        %765 = vmatprep.subr.mxu0 0.0
        %766 = vmatpush1.msra.mxu0 %v740
        %767 = vmatprep.subr.mxu0 0.0
        %768 = vmatpush1.msra.mxu0 %v741
        %769 = vmatprep.subr.mxu0 0.0
        %770 = vmatpush1.msra.mxu0 %v742
        %771 = vmatprep.subr.mxu0 0.0
        %772 = vmatpush1.msra.mxu0 %v743
        %773 = vmatprep.subr.mxu0 0.0
        %774 = vmatpush1.msra.mxu0 %v744
        %775 = vmatprep.subr.mxu0 0.0
        %776 = vmatpush1.msra.mxu0 %v745
        %777 = vmatprep.subr.mxu0 0.0
        %778 = vmatpush1.msra.mxu0 %v746
        %779 = vmatprep.subr.mxu0 0.0
        %780 = vmatpush1.msra.mxu0 %v747
        %781 = vmatprep.subr.mxu0 0.0
        %782 = vmatpush1.msra.mxu0 %v748
        %783 = vmatprep.subr.mxu0 0.0
        %784 = vmatpush1.msra.mxu0 %v749
        %785 = vmatprep.subr.mxu0 0.0
        %786 = vmatpush1.msra.mxu0 %v750
        %787 = vmatprep.subr.mxu0 0.0
        %788 = vmatpush1.msra.mxu0 %v751
        %789 = vmatprep.subr.mxu0 0.0
        %790 = vmatpush1.msra.mxu0 %v752
        %791 = vmatprep.subr.mxu0 0.0
        %792 = vmatpush1.msra.mxu0 %v753
        %793 = vmatprep.subr.mxu0 0.0
        %794 = vmatpush1.msra.mxu0 0.0
        %795 = vmatprep.subr.mxu0 0.0
        %796 = vmatpush1.msra.mxu0 0.0
        %797 = vmatprep.subr.mxu0 0.0
        %798 = vmatpush1.msra.mxu0 0.0
        %799 = vmatprep.subr.mxu0 0.0
        %800 = vmatpush1.msra.mxu0 0.0
        %801 = vmatprep.subr.mxu0 0.0
        %802 = vmatpush1.msra.mxu0 0.0
        %803 = vmatprep.subr.mxu0 0.0
        %804 = vmatpush1.msra.mxu0 0.0
        %805 = vmatprep.subr.mxu0 0.0
        %806 = vmatpush1.msra.mxu0 0.0
        %807 = vmatprep.subr.mxu0 0.0
        %808 = vmatpush1.msra.mxu0 0.0
        %809 = vmatprep.subr.mxu0 0.0
        %810 = vmatpush1.msra.mxu0 0.0
        %811 = vmatprep.subr.mxu0 0.0
        %812 = vmatpush1.msra.mxu0 0.0
        %813 = vmatprep.subr.mxu0 0.0
        %814 = vmatpush1.msra.mxu0 0.0
        %815 = vmatprep.subr.mxu0 0.0
        %816 = vmatpush1.msra.mxu0 0.0
        %817 = vmatprep.subr.mxu0 0.0
        %818 = vmatpush1.msra.mxu0 0.0
        %819 = vmatprep.subr.mxu0 0.0
        %820 = vmatpush1.msra.mxu0 0.0
        %821 = vmatprep.subr.mxu0 0.0
        %822 = vmatpush1.msra.mxu0 0.0
        %823 = vmatprep.subr.mxu0 0.0
        %824 = vmatpush1.msra.mxu0 0.0
        %825 = vmatprep.mubr.f32.mxu0 0.0
        %826 = vmatmul.mubr.f32.gmra.mrb[0].mxu0 %v737
        %v827 = vpop.f32.mrb[0].mxu0
        %v828 = vadd.f32 %v759, %v827
        %v829 = vpop.f32.mrb[0].mxu0
        %830 = vdwg.mxu0
        %v831 = vmax.f32 %v828, 0.0
        %v832 = vand.u32 2147483647, %v828
        %v833 = vsub.f32 0.0, %v832
        %v834 = vmul.f32 %v833, 1.442695
        %v835 = vpow.pop %v834
        %v836 = vadd.f32 %v835, 1.0
        %v837 = vlog2.pop %v836
        %v838 = vmul.f32 %v837, 0.6931472
        %v839 = vadd.f32 %v831, %v838
        %v840 = vsub.f32 %v839, 0.6931472
        %841 = vst [vmem:[#allocation4] sm:$0xff] %v840
        %s842 = smul.u32 %s40, 8
        loop: start=0, step=1, limit=8
        $region97: #{tpu_custom_call.1} parent=71 // loop_pre_header
          _
        $region98: #{tpu_custom_call.1} parent=71 // loop_header
          %s844 = sphi 0, %s848
          %p845 = scmp.ge.s32.totalorder %s844, 8
        $region99: #{tpu_custom_call.1} parent=71 // loop_header_branch
          %847 = sbr.rel (%p845) target = $region103
        $region100: #{tpu_custom_call.1} parent=71 // loop_body
          %s849 = sadd.s32 %s842, %s844
          %s850 = sld [smem:[#allocation6 + %s849]]
          %s851 = sld [smem:[#allocation7 + %s849]]
          %s852 = scalar_lea.vmem [#allocation2], %s850
          %v853 = vld [vmem:[%s852] sm:$0x1]
          %s854 = scalar_lea.vmem [#allocation4], %s844
          %v855 = vld [vmem:[%s854] sm:$0x1]
          %v856 = vmul.f32 %v853, %v855
          %s857 = scalar_lea.vmem [#allocation3], %s851
          %v858 = vld [vmem:[%s857] sm:$0x1]
          %v859 = vadd.f32 %v858, %v856
          %860 = vst [vmem:[%s857] sm:$0x1] %v859
        $region101: #{tpu_custom_call.1} parent=71 // loop_footer
          %s848 = sadd.s32 1, %s844
        $region102: #{tpu_custom_call.1} parent=71 // loop_footer_branch
          %843 = sbr.rel target = $region98
        $region103: #{tpu_custom_call.1} parent=71 // loop_exit
          _
        %p861 = scmp.eq.s32.totalorder %s40, 2
        // Predicated region
        $region104: #{tpu_custom_call.1} parent=71 // pred_check
          %p862 = pneg %p861
        $region105: #{tpu_custom_call.1} parent=71 // pred_check_branch
          %864 = sbr.rel (%p862) target = $region107
        $region106: #{tpu_custom_call.1} parent=71 // pred_region
          %v865 = vld [vmem:[#allocation3] sm:$0xff]
          %v866 = vld [vmem:[#allocation3 + $0x8] sm:$0xff]
          %v867 = vld [vmem:[#allocation14] sm:$0xff]
          %v868 = vld [vmem:[#allocation14 + $0x8] sm:$0xff]
          %v869 = vld [vmem:[#allocation14 + $0x10] sm:$0xff]
          %v870 = vld [vmem:[#allocation14 + $0x18] sm:$0xff]
          %v871 = vld [vmem:[#allocation14 + $0x20] sm:$0xff]
          %v872 = vld [vmem:[#allocation14 + $0x28] sm:$0xff]
          %v873 = vld [vmem:[#allocation14 + $0x30] sm:$0xff]
          %v874 = vld [vmem:[#allocation14 + $0x38] sm:$0xff]
          %v875 = vld [vmem:[#allocation14 + $0x40] sm:$0xff]
          %v876 = vld [vmem:[#allocation14 + $0x48] sm:$0xff]
          %v877 = vld [vmem:[#allocation14 + $0x50] sm:$0xff]
          %v878 = vld [vmem:[#allocation14 + $0x58] sm:$0xff]
          %v879 = vld [vmem:[#allocation14 + $0x60] sm:$0xff]
          %v880 = vld [vmem:[#allocation14 + $0x68] sm:$0xff]
          %v881 = vld [vmem:[#allocation14 + $0x70] sm:$0xff]
          %v882 = vld [vmem:[#allocation14 + $0x78] sm:$0xff]
          %v883 = vld [vmem:[%s12] sm:$0x1]
          %v885 = vlaneseq
          %v886 = vshrl.u32 %v885, 7
          %v887 = vsub.s32 0, %v886
          %v888 = vrot.slane %v883, %v887
          %890 = vmatprep.subr.mxu0 0.0
          %891 = vmatpush1.msra.mxu0 %v867
          %892 = vmatprep.subr.mxu0 0.0
          %893 = vmatpush1.msra.mxu0 %v868
          %894 = vmatprep.subr.mxu0 0.0
          %895 = vmatpush1.msra.mxu0 %v869
          %896 = vmatprep.subr.mxu0 0.0
          %897 = vmatpush1.msra.mxu0 %v870
          %898 = vmatprep.subr.mxu0 0.0
          %899 = vmatpush1.msra.mxu0 %v871
          %900 = vmatprep.subr.mxu0 0.0
          %901 = vmatpush1.msra.mxu0 %v872
          %902 = vmatprep.subr.mxu0 0.0
          %903 = vmatpush1.msra.mxu0 %v873
          %904 = vmatprep.subr.mxu0 0.0
          %905 = vmatpush1.msra.mxu0 %v874
          %906 = vmatprep.subr.mxu0 0.0
          %907 = vmatpush1.msra.mxu0 %v875
          %908 = vmatprep.subr.mxu0 0.0
          %909 = vmatpush1.msra.mxu0 %v876
          %910 = vmatprep.subr.mxu0 0.0
          %911 = vmatpush1.msra.mxu0 %v877
          %912 = vmatprep.subr.mxu0 0.0
          %913 = vmatpush1.msra.mxu0 %v878
          %914 = vmatprep.subr.mxu0 0.0
          %915 = vmatpush1.msra.mxu0 %v879
          %916 = vmatprep.subr.mxu0 0.0
          %917 = vmatpush1.msra.mxu0 %v880
          %918 = vmatprep.subr.mxu0 0.0
          %919 = vmatpush1.msra.mxu0 %v881
          %920 = vmatprep.subr.mxu0 0.0
          %921 = vmatpush1.msra.mxu0 %v882
          %922 = vmatprep.subr.mxu0 0.0
          %923 = vmatpush1.msra.mxu0 0.0
          %924 = vmatprep.subr.mxu0 0.0
          %925 = vmatpush1.msra.mxu0 0.0
          %926 = vmatprep.subr.mxu0 0.0
          %927 = vmatpush1.msra.mxu0 0.0
          %928 = vmatprep.subr.mxu0 0.0
          %929 = vmatpush1.msra.mxu0 0.0
          %930 = vmatprep.subr.mxu0 0.0
          %931 = vmatpush1.msra.mxu0 0.0
          %932 = vmatprep.subr.mxu0 0.0
          %933 = vmatpush1.msra.mxu0 0.0
          %934 = vmatprep.subr.mxu0 0.0
          %935 = vmatpush1.msra.mxu0 0.0
          %936 = vmatprep.subr.mxu0 0.0
          %937 = vmatpush1.msra.mxu0 0.0
          %938 = vmatprep.subr.mxu0 0.0
          %939 = vmatpush1.msra.mxu0 0.0
          %940 = vmatprep.subr.mxu0 0.0
          %941 = vmatpush1.msra.mxu0 0.0
          %942 = vmatprep.subr.mxu0 0.0
          %943 = vmatpush1.msra.mxu0 0.0
          %944 = vmatprep.subr.mxu0 0.0
          %945 = vmatpush1.msra.mxu0 0.0
          %946 = vmatprep.subr.mxu0 0.0
          %947 = vmatpush1.msra.mxu0 0.0
          %948 = vmatprep.subr.mxu0 0.0
          %949 = vmatpush1.msra.mxu0 0.0
          %950 = vmatprep.subr.mxu0 0.0
          %951 = vmatpush1.msra.mxu0 0.0
          %952 = vmatprep.subr.mxu0 0.0
          %953 = vmatpush1.msra.mxu0 0.0
          %954 = vmatprep.mubr.f32.mxu0 0.0
          %955 = vmatmul.mubr.f32.gmra.mrb[0].mxu0 %v865
          %v956 = vpop.f32.mrb[0].mxu0
          %v957 = vadd.f32 %v888, %v956
          %v958 = vpop.f32.mrb[0].mxu0
          %959 = vmatprep.mubr.f32.mxu0 0.0
          %960 = vmatmul.mubr.f32.gmra.mrb[0].mxu0 %v866
          %v961 = vpop.f32.mrb[0].mxu0
          %v962 = vadd.f32 %v888, %v961
          %v963 = vpop.f32.mrb[0].mxu0
          %964 = vdwg.mxu0
          %v965 = vmax.f32 %v957, 0.0
          %v966 = vmax.f32 %v962, 0.0
          %v967 = vand.u32 2147483647, %v957
          %v968 = vand.u32 2147483647, %v962
          %v969 = vsub.f32 0.0, %v967
          %v970 = vsub.f32 0.0, %v968
          %v971 = vmul.f32 %v969, 1.442695
          %v972 = vpow.pop %v971
          %v973 = vmul.f32 %v970, 1.442695
          %v974 = vpow.pop %v973
          %v975 = vadd.f32 %v972, 1.0
          %v976 = vadd.f32 %v974, 1.0
          %v977 = vlog2.pop %v975
          %v978 = vmul.f32 %v977, 0.6931472
          %v979 = vlog2.pop %v976
          %v980 = vmul.f32 %v979, 0.6931472
          %v981 = vadd.f32 %v965, %v978
          %v982 = vadd.f32 %v966, %v980
          %v983 = vsub.f32 %v981, 0.6931472
          %v984 = vsub.f32 %v982, 0.6931472
          %v985 = vmul.f32 %v983, 0.083333336
          %v986 = vmul.f32 %v984, 0.083333336
          %v987 = vld [vmem:[#allocation16] sm:$0xff]
          %v988 = vld [vmem:[#allocation16 + $0x8] sm:$0xff]
          %v989 = vld [vmem:[#allocation16 + $0x10] sm:$0xff]
          %v990 = vld [vmem:[#allocation16 + $0x18] sm:$0xff]
          %v991 = vld [vmem:[#allocation16 + $0x20] sm:$0xff]
          %v992 = vld [vmem:[#allocation16 + $0x28] sm:$0xff]
          %v993 = vld [vmem:[#allocation16 + $0x30] sm:$0xff]
          %v994 = vld [vmem:[#allocation16 + $0x38] sm:$0xff]
          %v995 = vld [vmem:[#allocation16 + $0x40] sm:$0xff]
          %v996 = vld [vmem:[#allocation16 + $0x48] sm:$0xff]
          %v997 = vld [vmem:[#allocation16 + $0x50] sm:$0xff]
          %v998 = vld [vmem:[#allocation16 + $0x58] sm:$0xff]
          %v999 = vld [vmem:[#allocation16 + $0x60] sm:$0xff]
          %v1000 = vld [vmem:[#allocation16 + $0x68] sm:$0xff]
          %v1001 = vld [vmem:[#allocation16 + $0x70] sm:$0xff]
          %v1002 = vld [vmem:[#allocation16 + $0x78] sm:$0xff]
          %v1003 = vld [vmem:[%s14] sm:$0x1]
          %v1005 = vlaneseq
          %v1006 = vshrl.u32 %v1005, 7
          %v1007 = vsub.s32 0, %v1006
          %v1008 = vrot.slane %v1003, %v1007
          %1010 = vmatprep.subr.mxu0 0.0
          %1011 = vmatpush1.msra.mxu0 %v987
          %1012 = vmatprep.subr.mxu0 0.0
          %1013 = vmatpush1.msra.mxu0 %v988
          %1014 = vmatprep.subr.mxu0 0.0
          %1015 = vmatpush1.msra.mxu0 %v989
          %1016 = vmatprep.subr.mxu0 0.0
          %1017 = vmatpush1.msra.mxu0 %v990
          %1018 = vmatprep.subr.mxu0 0.0
          %1019 = vmatpush1.msra.mxu0 %v991
          %1020 = vmatprep.subr.mxu0 0.0
          %1021 = vmatpush1.msra.mxu0 %v992
          %1022 = vmatprep.subr.mxu0 0.0
          %1023 = vmatpush1.msra.mxu0 %v993
          %1024 = vmatprep.subr.mxu0 0.0
          %1025 = vmatpush1.msra.mxu0 %v994
          %1026 = vmatprep.subr.mxu0 0.0
          %1027 = vmatpush1.msra.mxu0 %v995
          %1028 = vmatprep.subr.mxu0 0.0
          %1029 = vmatpush1.msra.mxu0 %v996
          %1030 = vmatprep.subr.mxu0 0.0
          %1031 = vmatpush1.msra.mxu0 %v997
          %1032 = vmatprep.subr.mxu0 0.0
          %1033 = vmatpush1.msra.mxu0 %v998
          %1034 = vmatprep.subr.mxu0 0.0
          %1035 = vmatpush1.msra.mxu0 %v999
          %1036 = vmatprep.subr.mxu0 0.0
          %1037 = vmatpush1.msra.mxu0 %v1000
          %1038 = vmatprep.subr.mxu0 0.0
          %1039 = vmatpush1.msra.mxu0 %v1001
          %1040 = vmatprep.subr.mxu0 0.0
          %1041 = vmatpush1.msra.mxu0 %v1002
          %1042 = vmatprep.subr.mxu0 0.0
          %1043 = vmatpush1.msra.mxu0 0.0
          %1044 = vmatprep.subr.mxu0 0.0
          %1045 = vmatpush1.msra.mxu0 0.0
          %1046 = vmatprep.subr.mxu0 0.0
          %1047 = vmatpush1.msra.mxu0 0.0
          %1048 = vmatprep.subr.mxu0 0.0
          %1049 = vmatpush1.msra.mxu0 0.0
          %1050 = vmatprep.subr.mxu0 0.0
          %1051 = vmatpush1.msra.mxu0 0.0
          %1052 = vmatprep.subr.mxu0 0.0
          %1053 = vmatpush1.msra.mxu0 0.0
          %1054 = vmatprep.subr.mxu0 0.0
          %1055 = vmatpush1.msra.mxu0 0.0
          %1056 = vmatprep.subr.mxu0 0.0
          %1057 = vmatpush1.msra.mxu0 0.0
          %1058 = vmatprep.subr.mxu0 0.0
          %1059 = vmatpush1.msra.mxu0 0.0
          %1060 = vmatprep.subr.mxu0 0.0
          %1061 = vmatpush1.msra.mxu0 0.0
          %1062 = vmatprep.subr.mxu0 0.0
          %1063 = vmatpush1.msra.mxu0 0.0
          %1064 = vmatprep.subr.mxu0 0.0
          %1065 = vmatpush1.msra.mxu0 0.0
          %1066 = vmatprep.subr.mxu0 0.0
          %1067 = vmatpush1.msra.mxu0 0.0
          %1068 = vmatprep.subr.mxu0 0.0
          %1069 = vmatpush1.msra.mxu0 0.0
          %1070 = vmatprep.subr.mxu0 0.0
          %1071 = vmatpush1.msra.mxu0 0.0
          %1072 = vmatprep.subr.mxu0 0.0
          %1073 = vmatpush1.msra.mxu0 0.0
          %1074 = vmatprep.mubr.f32.mxu0 0.0
          %1075 = vmatmul.mubr.f32.gmra.mrb[0].mxu0 %v985
          %v1076 = vpop.f32.mrb[0].mxu0
          %v1077 = vadd.f32 %v1008, %v1076
          %v1078 = vpop.f32.mrb[0].mxu0
          %1079 = vmatprep.mubr.f32.mxu0 0.0
          %1080 = vmatmul.mubr.f32.gmra.mrb[0].mxu0 %v986
          %v1081 = vpop.f32.mrb[0].mxu0
          %v1082 = vadd.f32 %v1008, %v1081
          %v1083 = vpop.f32.mrb[0].mxu0
          %1084 = vdwg.mxu0
          %v1085 = vmul.f32 %v1077, 0.083333336
          %v1086 = vmul.f32 %v1082, 0.083333336
          %v1087 = vlaneseq
          %v1088 = vshrl.u32 %v1087, 7
          %v1089 = vadd.s32 %v1088, 8
          %vm1090 = vcmp.lt.s32.totalorder %v1088, 10
          %vm1091 = vcmp.lt.s32.totalorder %v1089, 10
          %v1092 = vsel %vm1090, %v1085, 0.0
          %v1093 = vsel %vm1091, %v1086, 0.0
          %1094 = vst [vmem:[#allocation17] sm:$0xff] %v1092
          %1095 = vst [vmem:[#allocation17 + $0x8] sm:$0xff] %v1093
        $region107: #{tpu_custom_call.1} parent=71 // pred_fallthru
          _
        // Predicated region
        $region108: #{tpu_custom_call.1} parent=71 // pred_check
          %p1096 = pneg %p331
        $region109: #{tpu_custom_call.1} parent=71 // pred_check_branch
          %1098 = sbr.rel (%p1096) target = $region111
        $region110: #{tpu_custom_call.1} parent=71 // pred_region
          %s1100 = ssub.s32 256, 256
          %1101 = vsyncadd [#allocation10], %s1100
          %s1102 = sshll.u32 [#allocation17], 4
          %s1103 = int_to_ptr.vmem [resolvable:$true] %s1102
          %1108 = dma.vmem_to_hbm [thread:$0]  %s1103, 256, %s15, [#allocation10], 128, 128, 8
        $region111: #{tpu_custom_call.1} parent=71 // pred_fallthru
          _
        // Predicated region
        $region112: #{tpu_custom_call.1} parent=71 // pred_check
          %p1109 = pneg %p331
        $region113: #{tpu_custom_call.1} parent=71 // pred_check_branch
          %1111 = sbr.rel (%p1109) target = $region115
        $region114: #{tpu_custom_call.1} parent=71 // pred_region
          %1112 = dma.done [#allocation10], 256
        $region115: #{tpu_custom_call.1} parent=71 // pred_fallthru
          _
      $region72: #{tpu_custom_call.1} parent=5 // pred_fallthru
        _
      %p1113 = scmp.le.s32.totalorder 2, %s35
      // Predicated region
      $region116: #{tpu_custom_call.1} parent=5 // pred_check
        %p1114 = pneg %p1113
      $region117: #{tpu_custom_call.1} parent=5 // pred_check_branch
        %1116 = sbr.rel (%p1114) target = $region119
      $region118: #{tpu_custom_call.1} parent=5 // pred_region
        %s1117 = ssub.s32 %s35, 2
      $region119: #{tpu_custom_call.1} parent=5 // pred_fallthru
        _
    $region6: #{tpu_custom_call.1} parent=1 // loop_footer
      %s39 = sadd.s32 1, %s35
    $region7: #{tpu_custom_call.1} parent=1 // loop_footer_branch
      %34 = sbr.rel target = $region3
    $region8: #{tpu_custom_call.1} parent=1 // loop_exit
      _
    %1118 = vsyncpa [#allocation9], 1
    %s1119 = scalar_lea.sflag [#allocation9], 1
    %1120 = vsyncpa %s1119, 1
    %1121 = vsyncpa [#allocation12], 1
    %1122 = vsyncpa [#allocation15], 1
    %1123 = vsyncpa [#allocation10], 1
    %s1124 = scalar_lea.sflag [#allocation10], 1
    %1125 = vsyncpa %s1124, 1

</llo_original>
